<compile_context>
chip_gen: v6e
topology: v6e:2x2x1
jax: 0.10.0
libtpu: 0.0.40
codegen_flags: <defaults>
</compile_context>

<pallas_src>
import functools

import jax
import jax.numpy as jnp
from jax import lax
from jax.experimental import pallas as pl
from jax.experimental.pallas import tpu as pltpu

LAMBDA = 0.25
FEAT_DIM = 512          # CLIP projection dim
EPS = 1e-12             # F.normalize default eps
TILE_B = 256            # batch tile (multiple of 128; fills v6e/v7x MXU height)


def _round_up(x, m):
    return ((x + m - 1) // m) * m


def dnclip_kernel(img_ref, txt_ref, wimg_ref, wtxt_ref, ic_ref, tc_ref, out_ref,
                  *, batch, tile_b):
    # Cast activations to bf16 right before the MXU (no-op if already bf16);
    # accumulation stays f32 via preferred_element_type.
    img = img_ref[...].astype(jnp.bfloat16)
    txt = txt_ref[...].astype(jnp.bfloat16)
    img_feat = jnp.dot(img, wimg_ref[...], preferred_element_type=jnp.float32)
    txt_feat = jnp.dot(txt, wtxt_ref[...], preferred_element_type=jnp.float32)

    # F.normalize(x): x / max(||x||_2, eps) == x * rsqrt(max(sum(x^2), eps^2))
    def l2_normalize(x):
        sumsq = jnp.sum(x * x, axis=-1, keepdims=True)
        inv = lax.rsqrt(jnp.maximum(sumsq, EPS * EPS))
        return x * inv

    # Feature debiasing with (zero-initialized) constants.
    img_feat = l2_normalize(img_feat) - LAMBDA * ic_ref[...]
    txt_feat = l2_normalize(txt_feat) - LAMBDA * tc_ref[...]

    # similarity = sum over feature dim; stored lane-dense as (1, tile_b).
    sim = jnp.sum(img_feat * txt_feat, axis=-1)              # (tile_b,)

    # Mask rows past the real batch (cdiv-grid tail reads undefined data);
    # keeps discarded lanes at exactly 0 instead of potential NaN garbage.
    row = (pl.program_id(0) * tile_b
           + lax.broadcasted_iota(jnp.int32, (1, tile_b), 1))
    out_ref[...] = jnp.where(row < batch, sim[None, :], 0.0)


def dnclip_score(images, text_tokens, params, *, tile_b=TILE_B, host_cast=False):
    """images: [B, C, H, W] float32 (NCHW, like PyTorch); text_tokens: [B, S] int32.

    host_cast=False (default): stream f32 activations and cast to bf16 inside
    the kernel (best on mem-bound v6e/v7x).  host_cast=True: pre-cast to bf16
    in XLA (preferred on MXU-bound v5e).
    """
    B = images.shape[0]

    # Glue: flatten NCHW images; embed + mean-pool text tokens (plain JAX).
    img_flat = images.reshape(B, -1).astype(jnp.float32)              # [B, C*H*W]
    txt_emb = jnp.mean(jnp.take(params["tok_emb"], text_tokens, axis=0), axis=1)

    img_dim = img_flat.shape[1]
    t_dim = txt_emb.shape[1]

    if host_cast:
        img_flat = img_flat.astype(jnp.bfloat16)
        txt_emb = txt_emb.astype(jnp.bfloat16)

    # Weights are tiny and grid-invariant: pre-cast to bf16 once (halves their
    # per-step VMEM/DMA footprint).
    w_img = params["w_img"].astype(jnp.bfloat16)
    w_txt = params["w_txt"].astype(jnp.bfloat16)
    img_const = params["image_constant"].reshape(1, FEAT_DIM).astype(jnp.float32)
    txt_const = params["text_constant"].reshape(1, FEAT_DIM).astype(jnp.float32)

    # Clamp tile for small batches; keep a multiple of 8 (sublane alignment).
    tile_b = min(tile_b, _round_up(B, 8))
    num_tiles = pl.cdiv(B, tile_b)
    b_pad = num_tiles * tile_b          # output is padded, inputs are NOT

    cost = pl.CostEstimate(
        flops=2 * b_pad * (img_dim + t_dim) * FEAT_DIM + 8 * b_pad * FEAT_DIM,
        transcendentals=2 * b_pad,
        bytes_accessed=(img_flat.size * img_flat.dtype.itemsize
                        + txt_emb.size * txt_emb.dtype.itemsize
                        + num_tiles * (w_img.size * 2 + w_txt.size * 2
                                       + (img_const.size + txt_const.size) * 4)
                        + b_pad * 4),
    )

    kernel = functools.partial(dnclip_kernel, batch=B, tile_b=tile_b)

    sim = pl.pallas_call(
        kernel,
        out_shape=jax.ShapeDtypeStruct((1, b_pad), jnp.float32),
        grid=(num_tiles,),
        in_specs=[
            pl.BlockSpec((tile_b, img_dim), lambda i: (i, 0)),      # image tile
            pl.BlockSpec((tile_b, t_dim), lambda i: (i, 0)),        # text tile
            pl.BlockSpec((img_dim, FEAT_DIM), lambda i: (0, 0)),    # W_img (resident)
            pl.BlockSpec((t_dim, FEAT_DIM), lambda i: (0, 0)),      # W_txt (resident)
            pl.BlockSpec((1, FEAT_DIM), lambda i: (0, 0)),          # image_constant
            pl.BlockSpec((1, FEAT_DIM), lambda i: (0, 0)),          # text_constant
        ],
        out_specs=pl.BlockSpec((1, tile_b), lambda i: (0, i)),      # lane-dense out
        compiler_params=pltpu.CompilerParams(
            dimension_semantics=("parallel",),
        ),
        cost_estimate=cost,
    )(img_flat, txt_emb, w_img, w_txt, img_const, txt_const)

    return sim[0, :B]  # [B]


def reference(images, text_tokens, params):
    """Pure-JAX reference mirroring the bf16-operand / f32-accumulate matmuls."""
    B = images.shape[0]
    img_flat = images.reshape(B, -1).astype(jnp.float32)
    txt_emb = jnp.mean(jnp.take(params["tok_emb"], text_tokens, axis=0), axis=1)
    fi = jnp.dot(img_flat.astype(jnp.bfloat16), params["w_img"].astype(jnp.bfloat16),
                 preferred_element_type=jnp.float32)
    ft = jnp.dot(txt_emb.astype(jnp.bfloat16), params["w_txt"].astype(jnp.bfloat16),
                 preferred_element_type=jnp.float32)
    fi = fi / jnp.maximum(jnp.linalg.norm(fi, axis=-1, keepdims=True), EPS)
    ft = ft / jnp.maximum(jnp.linalg.norm(ft, axis=-1, keepdims=True), EPS)
    fi = fi - LAMBDA * params["image_constant"]
    ft = ft - LAMBDA * params["text_constant"]
    return jnp.sum(fi * ft, axis=1)


if __name__ == "__main__":
    key = jax.random.PRNGKey(0)
    B, C, H, W = 8, 3, 16, 16       # small NCHW images
    S, VOCAB, T_DIM = 8, 64, 64     # small text: 8 tokens, 64-d token embedding
    IMG_DIM = C * H * W             # 768

    k0, k1, k2, k3, k4 = jax.random.split(key, 5)
    images = jax.random.normal(k0, (B, C, H, W), dtype=jnp.float32)
    text = jax.random.randint(k1, (B, S), 0, VOCAB, dtype=jnp.int32)

    # Deterministic synthetic "CLIP" parameters.
    params = {
        "w_img": jax.random.normal(k2, (IMG_DIM, FEAT_DIM), jnp.float32) * 0.02,
        "w_txt": jax.random.normal(k3, (T_DIM, FEAT_DIM), jnp.float32) * 0.02,
        "tok_emb": jax.random.normal(k4, (VOCAB, T_DIM), jnp.float32) * 0.02,
        # module __init__: torch.zeros(512) for both constants
        "image_constant": jnp.zeros((FEAT_DIM,), jnp.float32),
        "text_constant": jnp.zeros((FEAT_DIM,), jnp.float32),
    }

    sim = jax.block_until_ready(dnclip_score(images, text, params))
    ref = jax.block_until_ready(reference(images, text, params))
    assert sim.shape == (B,)
    assert jnp.allclose(sim, ref, atol=1e-4, rtol=1e-3), (sim, ref)

    # Also exercise the v5e-style host-cast path once for coverage.
    sim_hc = jax.block_until_ready(
        dnclip_score(images, text, params, host_cast=True))
    assert jnp.allclose(sim_hc, ref, atol=1e-4, rtol=1e-3), (sim_hc, ref)

    print("KERNEL_OK")
</pallas_src>

<mosaic_0001>
module attributes {stable_mosaic.version = 11 : i64} {
  func.func @dnclip_kernel(%arg0: i32, %arg1: memref<8x768xf32, #tpu.memory_space<vmem>>, %arg2: memref<8x64xf32, #tpu.memory_space<vmem>>, %arg3: memref<768x512xbf16, #tpu.memory_space<vmem>>, %arg4: memref<64x512xbf16, #tpu.memory_space<vmem>>, %arg5: memref<1x512xf32, #tpu.memory_space<vmem>>, %arg6: memref<1x512xf32, #tpu.memory_space<vmem>>, %arg7: memref<1x8xf32, #tpu.memory_space<vmem>>) attributes {dimension_semantics = [#tpu.dimension_semantics<parallel>], iteration_bounds = array<i64: 1>, scalar_prefetch = 0 : i64, scratch_operands = 0 : i64, tpu.core_type = #tpu.core_type<tc>, window_params = [{transform_indices = @transform_0, window_bounds = array<i64: 8, 768>}, {transform_indices = @transform_1, window_bounds = array<i64: 8, 64>}, {pipeline_mode = #tpu.pipeline_mode<synchronous>, transform_indices = @transform_2, window_bounds = array<i64: 768, 512>}, {pipeline_mode = #tpu.pipeline_mode<synchronous>, transform_indices = @transform_3, window_bounds = array<i64: 64, 512>}, {pipeline_mode = #tpu.pipeline_mode<synchronous>, transform_indices = @transform_4, window_bounds = array<i64: 1, 512>}, {pipeline_mode = #tpu.pipeline_mode<synchronous>, transform_indices = @transform_5, window_bounds = array<i64: 1, 512>}, {transform_indices = @transform_6, window_bounds = array<i64: 1, 8>}]} {
    %c0 = arith.constant 0 : index
    %c0_0 = arith.constant 0 : index
    %0 = vector.load %arg1[%c0, %c0_0] : memref<8x768xf32, #tpu.memory_space<vmem>>, vector<8x768xf32>
    %1 = arith.truncf %0 : vector<8x768xf32> to vector<8x768xbf16>
    %c0_1 = arith.constant 0 : index
    %c0_2 = arith.constant 0 : index
    %2 = vector.load %arg2[%c0_1, %c0_2] : memref<8x64xf32, #tpu.memory_space<vmem>>, vector<8x64xf32>
    %3 = arith.truncf %2 : vector<8x64xf32> to vector<8x64xbf16>
    %c0_3 = arith.constant 0 : index
    %c0_4 = arith.constant 0 : index
    %4 = vector.load %arg3[%c0_3, %c0_4] : memref<768x512xbf16, #tpu.memory_space<vmem>>, vector<768x512xbf16>
    %cst = arith.constant dense<0.000000e+00> : vector<8x512xf32>
    %5 = tpu.matmul %1, %4, %cst {dimension_numbers = #tpu.dot_dimension_numbers<[1], [0], [0], [1], [0, 0, 1, 1], [], []>} : vector<8x768xbf16>, vector<768x512xbf16>, vector<8x512xf32> -> vector<8x512xf32>
    %c0_5 = arith.constant 0 : index
    %c0_6 = arith.constant 0 : index
    %6 = vector.load %arg4[%c0_5, %c0_6] : memref<64x512xbf16, #tpu.memory_space<vmem>>, vector<64x512xbf16>
    %cst_7 = arith.constant dense<0.000000e+00> : vector<8x512xf32>
    %7 = tpu.matmul %3, %6, %cst_7 {dimension_numbers = #tpu.dot_dimension_numbers<[1], [0], [0], [1], [0, 0, 1, 1], [], []>} : vector<8x64xbf16>, vector<64x512xbf16>, vector<8x512xf32> -> vector<8x512xf32>
    %8 = arith.mulf %5, %5 : vector<8x512xf32>
    %cst_8 = arith.constant dense<0.000000e+00> : vector<8xf32>
    %9 = vector.multi_reduction <add>, %8, %cst_8 [1] : vector<8x512xf32> to vector<8xf32>
    %10 = vector.shape_cast %9 : vector<8xf32> to vector<8x1xf32>
    %cst_9 = arith.constant 1.000000e-24 : f32
    %11 = vector.broadcast %cst_9 : f32 to vector<8x1xf32>
    %12 = arith.maximumf %10, %11 : vector<8x1xf32>
    %13 = math.rsqrt %12 : vector<8x1xf32>
    %14 = vector.broadcast %13 : vector<8x1xf32> to vector<8x512xf32>
    %15 = arith.mulf %5, %14 : vector<8x512xf32>
    %c0_10 = arith.constant 0 : index
    %c0_11 = arith.constant 0 : index
    %16 = vector.load %arg5[%c0_10, %c0_11] : memref<1x512xf32, #tpu.memory_space<vmem>>, vector<1x512xf32>
    %cst_12 = arith.constant 2.500000e-01 : f32
    %17 = vector.broadcast %cst_12 : f32 to vector<1x512xf32>
    %18 = arith.mulf %17, %16 : vector<1x512xf32>
    %19 = vector.broadcast %18 : vector<1x512xf32> to vector<8x512xf32>
    %20 = arith.subf %15, %19 : vector<8x512xf32>
    %21 = arith.mulf %7, %7 : vector<8x512xf32>
    %cst_13 = arith.constant dense<0.000000e+00> : vector<8xf32>
    %22 = vector.multi_reduction <add>, %21, %cst_13 [1] : vector<8x512xf32> to vector<8xf32>
    %23 = vector.shape_cast %22 : vector<8xf32> to vector<8x1xf32>
    %cst_14 = arith.constant 1.000000e-24 : f32
    %24 = vector.broadcast %cst_14 : f32 to vector<8x1xf32>
    %25 = arith.maximumf %23, %24 : vector<8x1xf32>
    %26 = math.rsqrt %25 : vector<8x1xf32>
    %27 = vector.broadcast %26 : vector<8x1xf32> to vector<8x512xf32>
    %28 = arith.mulf %7, %27 : vector<8x512xf32>
    %c0_15 = arith.constant 0 : index
    %c0_16 = arith.constant 0 : index
    %29 = vector.load %arg6[%c0_15, %c0_16] : memref<1x512xf32, #tpu.memory_space<vmem>>, vector<1x512xf32>
    %cst_17 = arith.constant 2.500000e-01 : f32
    %30 = vector.broadcast %cst_17 : f32 to vector<1x512xf32>
    %31 = arith.mulf %30, %29 : vector<1x512xf32>
    %32 = vector.broadcast %31 : vector<1x512xf32> to vector<8x512xf32>
    %33 = arith.subf %28, %32 : vector<8x512xf32>
    %34 = arith.mulf %20, %33 : vector<8x512xf32>
    %cst_18 = arith.constant dense<0.000000e+00> : vector<8xf32>
    %35 = vector.multi_reduction <add>, %34, %cst_18 [1] : vector<8x512xf32> to vector<8xf32>
    %c8_i32 = arith.constant 8 : i32
    %36 = arith.muli %arg0, %c8_i32 : i32
    %37 = tpu.iota {dimensions = array<i32: 1>} : vector<1x8xi32>
    %38 = vector.broadcast %36 : i32 to vector<1x8xi32>
    %39 = arith.addi %38, %37 : vector<1x8xi32>
    %c8_i32_19 = arith.constant 8 : i32
    %40 = vector.broadcast %c8_i32_19 : i32 to vector<1x8xi32>
    %41 = arith.cmpi slt, %39, %40 : vector<1x8xi32>
    %42 = vector.shape_cast %35 : vector<8xf32> to vector<1x8xf32>
    %cst_20 = arith.constant 0.000000e+00 : f32
    %43 = vector.broadcast %cst_20 : f32 to vector<1x8xf32>
    %44 = arith.select %41, %42, %43 : vector<1x8xi1>, vector<1x8xf32>
    %c0_21 = arith.constant 0 : index
    %c0_22 = arith.constant 0 : index
    %45 = vector.load %arg7[%c0_21, %c0_22] : memref<1x8xf32, #tpu.memory_space<vmem>>, vector<1x8xf32>
    tpu.vector_store %arg7[%c0_21, %c0_22], %44 {strides = array<i32>} : memref<1x8xf32, #tpu.memory_space<vmem>>, vector<1x8xf32>,
    return
  }
  func.func @transform_0(%arg0: i32) -> (i32, i32) {
    %c0_i32 = arith.constant 0 : i32
    %c0_i32_0 = arith.constant 0 : i32
    return %arg0, %c0_i32 : i32, i32
  }
  func.func @transform_1(%arg0: i32) -> (i32, i32) {
    %c0_i32 = arith.constant 0 : i32
    %c0_i32_0 = arith.constant 0 : i32
    return %arg0, %c0_i32 : i32, i32
  }
  func.func @transform_2(%arg0: i32) -> (i32, i32) {
    %c0_i32 = arith.constant 0 : i32
    %c0_i32_0 = arith.constant 0 : i32
    %c0_i32_1 = arith.constant 0 : i32
    return %c0_i32, %c0_i32_0 : i32, i32
  }
  func.func @transform_3(%arg0: i32) -> (i32, i32) {
    %c0_i32 = arith.constant 0 : i32
    %c0_i32_0 = arith.constant 0 : i32
    %c0_i32_1 = arith.constant 0 : i32
    return %c0_i32, %c0_i32_0 : i32, i32
  }
  func.func @transform_4(%arg0: i32) -> (i32, i32) {
    %c0_i32 = arith.constant 0 : i32
    %c0_i32_0 = arith.constant 0 : i32
    %c0_i32_1 = arith.constant 0 : i32
    return %c0_i32, %c0_i32_0 : i32, i32
  }
  func.func @transform_5(%arg0: i32) -> (i32, i32) {
    %c0_i32 = arith.constant 0 : i32
    %c0_i32_0 = arith.constant 0 : i32
    %c0_i32_1 = arith.constant 0 : i32
    return %c0_i32, %c0_i32_0 : i32, i32
  }
  func.func @transform_6(%arg0: i32) -> (i32, i32) {
    %c0_i32 = arith.constant 0 : i32
    %c0_i32_0 = arith.constant 0 : i32
    return %c0_i32, %arg0 : i32, i32
  }
}

</mosaic_0001>

<llo_original>
// kernel: tpu_custom_call.1
$region0: #{tpu_custom_call.1}
  #allocation0 [shape = 'u32[]', space=smem, size = 0x4, offset = 0x4, fixed_abs, tag = 'smem constant byte address 0x4 - core index']
  #allocation1 [shape = 'u32[144,128]{1,0:T(1,128)}', space=vmem, size = 0x12000, scoped, tag = 'internal scratch']
  %s0 = inlined_call_operand.hbm [shape: f32[8,768], index: 0, kind: input, shape index: {}]
  %s1 = inlined_call_operand.hbm [shape: f32[8,64], index: 1, kind: input, shape index: {}]
  %s2 = inlined_call_operand.hbm [shape: bf16[768,512], index: 2, kind: input, shape index: {}]
  %s3 = inlined_call_operand.hbm [shape: bf16[64,512], index: 3, kind: input, shape index: {}]
  %s4 = inlined_call_operand.vmem [shape: f32[1,512], index: 4, kind: input, shape index: {}]
  %s5 = inlined_call_operand.vmem [shape: f32[1,512], index: 5, kind: input, shape index: {}]
  %s6 = inlined_call_operand.hbm [shape: f32[1,8], index: 6, kind: output, shape index: {}]
  %s7 = sld [smem:[#allocation0]]
  $region50: #{tpu_custom_call.1} parent=0
    _
  %s9 = ssub.s32 1, %s7
  %s10 = scalar_select 0, %s9, %s7
  $region1: #{tpu_custom_call.1} parent=0
    #allocation2 [shape = 'u8[24576]{0}', space=vmem, size = 0x6000, scoped, tag = 'input window, operand 0, single buffered']
    #allocation3 [shape = 's32[1]{0}', space=sflag, size = 0x4, scoped, tag = 'scoped memory for tpu_custom_call.1']
    #allocation4 [shape = 's32[1]{0}', space=sflag, size = 0x4, scoped, tag = 'scoped memory for tpu_custom_call.1']
    #allocation5 [shape = 'u8[4096]{0}', space=vmem, size = 0x1000, scoped, tag = 'input window, operand 1, single buffered']
    #allocation6 [shape = 's32[1]{0}', space=sflag, size = 0x4, scoped, tag = 'scoped memory for tpu_custom_call.1']
    #allocation7 [shape = 'u8[786432]{0}', space=vmem, size = 0xc0000, scoped, tag = 'input window, operand 2, single buffered']
    #allocation8 [shape = 'u8[65536]{0}', space=vmem, size = 0x10000, scoped, tag = 'input window, operand 3, single buffered']
    #allocation9 [shape = 's32[1]{0}', space=sflag, size = 0x4, scoped, tag = 'scoped memory for tpu_custom_call.1']
    #allocation10 [shape = 'u8[512]{0}', space=vmem, size = 0x400, scoped, tag = 'output window, operand 0, single buffered']
    %11 = vsyncpa [#allocation3], 0
    %12 = vsyncpa [#allocation6], 0
    %13 = vsyncpa [#allocation9], 0
    %14 = vsyncpa [#allocation4], 0
    // Predicated region
    $region2: #{tpu_custom_call.1} parent=1 // pred_check
      _
    $region3: #{tpu_custom_call.1} parent=1 // pred_check_branch
      %16 = sbr.rel (0) target = $region5
    $region4: #{tpu_custom_call.1} parent=1 // pred_region
      %s18 = ssub.s32 768, 768
      %19 = vsyncadd [#allocation3], %s18
      %s21 = sshll.u32 [#allocation2], 4
      %s22 = int_to_ptr.vmem [resolvable:$true] %s21
      %24 = dma.hbm_to_vmem [thread:$0]  %s0, 768, %s22, [#allocation3]
    $region5: #{tpu_custom_call.1} parent=1 // pred_fallthru
      _
    // Predicated region
    $region6: #{tpu_custom_call.1} parent=1 // pred_check
      _
    $region7: #{tpu_custom_call.1} parent=1 // pred_check_branch
      %26 = sbr.rel (0) target = $region9
    $region8: #{tpu_custom_call.1} parent=1 // pred_region
      %s28 = ssub.s32 128, 128
      %29 = vsyncadd [#allocation6], %s28
      %s31 = sshll.u32 [#allocation5], 4
      %s32 = int_to_ptr.vmem [resolvable:$true] %s31
      %34 = dma.hbm_to_vmem [thread:$0]  %s1, 128, %s32, [#allocation6]
    $region9: #{tpu_custom_call.1} parent=1 // pred_fallthru
      _
    // Predicated region
    $region10: #{tpu_custom_call.1} parent=1 // pred_check
      _
    $region11: #{tpu_custom_call.1} parent=1 // pred_check_branch
      %36 = sbr.rel (0) target = $region13
    $region12: #{tpu_custom_call.1} parent=1 // pred_region
      %s38 = ssub.s32 24576, 24576
      %39 = vsyncadd [#allocation6], %s38
      %s40 = sshll.u32 [#allocation7], 4
      %s41 = int_to_ptr.vmem [resolvable:$true] %s40
      %46 = dma.hbm_to_vmem [thread:$0]  %s2, 24576, %s41, [#allocation6], 256, 256, 16
    $region13: #{tpu_custom_call.1} parent=1 // pred_fallthru
      _
    // Predicated region
    $region14: #{tpu_custom_call.1} parent=1 // pred_check
      _
    $region15: #{tpu_custom_call.1} parent=1 // pred_check_branch
      %48 = sbr.rel (0) target = $region17
    $region16: #{tpu_custom_call.1} parent=1 // pred_region
      %s50 = ssub.s32 2048, 2048
      %51 = vsyncadd [#allocation9], %s50
      %s52 = sshll.u32 [#allocation8], 4
      %s53 = int_to_ptr.vmem [resolvable:$true] %s52
      %58 = dma.hbm_to_vmem [thread:$0]  %s3, 2048, %s53, [#allocation9], 256, 256, 16
    $region17: #{tpu_custom_call.1} parent=1 // pred_fallthru
      _
    // Predicated region
    $region18: #{tpu_custom_call.1} parent=1 // pred_check
      _
    $region19: #{tpu_custom_call.1} parent=1 // pred_check_branch
      %60 = sbr.rel (0) target = $region21
    $region20: #{tpu_custom_call.1} parent=1 // pred_region
      _
    $region21: #{tpu_custom_call.1} parent=1 // pred_fallthru
      _
    // Predicated region
    $region22: #{tpu_custom_call.1} parent=1 // pred_check
      _
    $region23: #{tpu_custom_call.1} parent=1 // pred_check_branch
      %62 = sbr.rel (0) target = $region25
    $region24: #{tpu_custom_call.1} parent=1 // pred_region
      _
    $region25: #{tpu_custom_call.1} parent=1 // pred_fallthru
      _
    // Predicated region
    $region26: #{tpu_custom_call.1} parent=1 // pred_check
      _
    $region27: #{tpu_custom_call.1} parent=1 // pred_check_branch
      %64 = sbr.rel (0) target = $region29
    $region28: #{tpu_custom_call.1} parent=1 // pred_region
      %65 = dma.done [#allocation3], 768
    $region29: #{tpu_custom_call.1} parent=1 // pred_fallthru
      _
    // Predicated region
    $region30: #{tpu_custom_call.1} parent=1 // pred_check
      _
    $region31: #{tpu_custom_call.1} parent=1 // pred_check_branch
      %67 = sbr.rel (0) target = $region33
    $region32: #{tpu_custom_call.1} parent=1 // pred_region
      %68 = dma.done [#allocation6], 128
    $region33: #{tpu_custom_call.1} parent=1 // pred_fallthru
      _
    // Predicated region
    $region34: #{tpu_custom_call.1} parent=1 // pred_check
      _
    $region35: #{tpu_custom_call.1} parent=1 // pred_check_branch
      %70 = sbr.rel (0) target = $region37
    $region36: #{tpu_custom_call.1} parent=1 // pred_region
      %71 = dma.done [#allocation6], 24576
    $region37: #{tpu_custom_call.1} parent=1 // pred_fallthru
      _
    // Predicated region
    $region38: #{tpu_custom_call.1} parent=1 // pred_check
      _
    $region39: #{tpu_custom_call.1} parent=1 // pred_check_branch
      %73 = sbr.rel (0) target = $region41
    $region40: #{tpu_custom_call.1} parent=1 // pred_region
      %74 = dma.done [#allocation9], 2048
    $region41: #{tpu_custom_call.1} parent=1 // pred_fallthru
      _
    %v76 = vld [vmem:[#allocation2] sm:$0xff]
    %v77 = vld [vmem:[#allocation2 + $0x8] sm:$0xff]
    %v78 = vld [vmem:[#allocation2 + $0x10] sm:$0xff]
    %v79 = vld [vmem:[#allocation2 + $0x18] sm:$0xff]
    %v80 = vld [vmem:[#allocation2 + $0x20] sm:$0xff]
    %v81 = vld [vmem:[#allocation2 + $0x28] sm:$0xff]
    %v82 = vpack.c.bf16 %v76, %v76
    %v83 = vpack.c.bf16 %v77, %v77
    %v84 = vpack.c.bf16 %v78, %v78
    %v85 = vpack.c.bf16 %v79, %v79
    %v86 = vpack.c.bf16 %v80, %v80
    %v87 = vpack.c.bf16 %v81, %v81
    %v88 = vld [vmem:[#allocation5] sm:$0xff]
    %v89 = vpack.c.bf16 %v88, %v88
    %v90 = vld [vmem:[#allocation7] sm:$0xff]
    %v91 = vld [vmem:[#allocation7 + $0x8] sm:$0xff]
    %v92 = vld [vmem:[#allocation7 + $0x10] sm:$0xff]
    %v93 = vld [vmem:[#allocation7 + $0x18] sm:$0xff]
    %v94 = vld [vmem:[#allocation7 + $0x20] sm:$0xff]
    %v95 = vld [vmem:[#allocation7 + $0x28] sm:$0xff]
    %v96 = vld [vmem:[#allocation7 + $0x30] sm:$0xff]
    %v97 = vld [vmem:[#allocation7 + $0x38] sm:$0xff]
    %v98 = vld [vmem:[#allocation7 + $0x40] sm:$0xff]
    %v99 = vld [vmem:[#allocation7 + $0x48] sm:$0xff]
    %v100 = vld [vmem:[#allocation7 + $0x50] sm:$0xff]
    %v101 = vld [vmem:[#allocation7 + $0x58] sm:$0xff]
    %v102 = vld [vmem:[#allocation7 + $0x60] sm:$0xff]
    %v103 = vld [vmem:[#allocation7 + $0x68] sm:$0xff]
    %v104 = vld [vmem:[#allocation7 + $0x70] sm:$0xff]
    %v105 = vld [vmem:[#allocation7 + $0x78] sm:$0xff]
    %v106 = vld [vmem:[#allocation7 + $0x80] sm:$0xff]
    %v107 = vld [vmem:[#allocation7 + $0x88] sm:$0xff]
    %v108 = vld [vmem:[#allocation7 + $0x90] sm:$0xff]
    %v109 = vld [vmem:[#allocation7 + $0x98] sm:$0xff]
    %v110 = vld [vmem:[#allocation7 + $0xa0] sm:$0xff]
    %v111 = vld [vmem:[#allocation7 + $0xa8] sm:$0xff]
    %v112 = vld [vmem:[#allocation7 + $0xb0] sm:$0xff]
    %v113 = vld [vmem:[#allocation7 + $0xb8] sm:$0xff]
    %v114 = vld [vmem:[#allocation7 + $0xc0] sm:$0xff]
    %v115 = vld [vmem:[#allocation7 + $0xc8] sm:$0xff]
    %v116 = vld [vmem:[#allocation7 + $0xd0] sm:$0xff]
    %v117 = vld [vmem:[#allocation7 + $0xd8] sm:$0xff]
    %v118 = vld [vmem:[#allocation7 + $0xe0] sm:$0xff]
    %v119 = vld [vmem:[#allocation7 + $0xe8] sm:$0xff]
    %v120 = vld [vmem:[#allocation7 + $0xf0] sm:$0xff]
    %v121 = vld [vmem:[#allocation7 + $0xf8] sm:$0xff]
    %v122 = vld [vmem:[#allocation7 + $0x100] sm:$0xff]
    %v123 = vld [vmem:[#allocation7 + $0x108] sm:$0xff]
    %v124 = vld [vmem:[#allocation7 + $0x110] sm:$0xff]
    %v125 = vld [vmem:[#allocation7 + $0x118] sm:$0xff]
    %v126 = vld [vmem:[#allocation7 + $0x120] sm:$0xff]
    %v127 = vld [vmem:[#allocation7 + $0x128] sm:$0xff]
    %v128 = vld [vmem:[#allocation7 + $0x130] sm:$0xff]
    %v129 = vld [vmem:[#allocation7 + $0x138] sm:$0xff]
    %v130 = vld [vmem:[#allocation7 + $0x140] sm:$0xff]
    %v131 = vld [vmem:[#allocation7 + $0x148] sm:$0xff]
    %v132 = vld [vmem:[#allocation7 + $0x150] sm:$0xff]
    %v133 = vld [vmem:[#allocation7 + $0x158] sm:$0xff]
    %v134 = vld [vmem:[#allocation7 + $0x160] sm:$0xff]
    %v135 = vld [vmem:[#allocation7 + $0x168] sm:$0xff]
    %v136 = vld [vmem:[#allocation7 + $0x170] sm:$0xff]
    %v137 = vld [vmem:[#allocation7 + $0x178] sm:$0xff]
    %v138 = vld [vmem:[#allocation7 + $0x180] sm:$0xff]
    %v139 = vld [vmem:[#allocation7 + $0x188] sm:$0xff]
    %v140 = vld [vmem:[#allocation7 + $0x190] sm:$0xff]
    %v141 = vld [vmem:[#allocation7 + $0x198] sm:$0xff]
    %v142 = vld [vmem:[#allocation7 + $0x1a0] sm:$0xff]
    %v143 = vld [vmem:[#allocation7 + $0x1a8] sm:$0xff]
    %v144 = vld [vmem:[#allocation7 + $0x1b0] sm:$0xff]
    %v145 = vld [vmem:[#allocation7 + $0x1b8] sm:$0xff]
    %v146 = vld [vmem:[#allocation7 + $0x1c0] sm:$0xff]
    %v147 = vld [vmem:[#allocation7 + $0x1c8] sm:$0xff]
    %v148 = vld [vmem:[#allocation7 + $0x1d0] sm:$0xff]
    %v149 = vld [vmem:[#allocation7 + $0x1d8] sm:$0xff]
    %v150 = vld [vmem:[#allocation7 + $0x1e0] sm:$0xff]
    %v151 = vld [vmem:[#allocation7 + $0x1e8] sm:$0xff]
    %v152 = vld [vmem:[#allocation7 + $0x1f0] sm:$0xff]
    %v153 = vld [vmem:[#allocation7 + $0x1f8] sm:$0xff]
    %v154 = vld [vmem:[#allocation7 + $0x200] sm:$0xff]
    %v155 = vld [vmem:[#allocation7 + $0x208] sm:$0xff]
    %v156 = vld [vmem:[#allocation7 + $0x210] sm:$0xff]
    %v157 = vld [vmem:[#allocation7 + $0x218] sm:$0xff]
    %v158 = vld [vmem:[#allocation7 + $0x220] sm:$0xff]
    %v159 = vld [vmem:[#allocation7 + $0x228] sm:$0xff]
    %v160 = vld [vmem:[#allocation7 + $0x230] sm:$0xff]
    %v161 = vld [vmem:[#allocation7 + $0x238] sm:$0xff]
    %v162 = vld [vmem:[#allocation7 + $0x240] sm:$0xff]
    %v163 = vld [vmem:[#allocation7 + $0x248] sm:$0xff]
    %v164 = vld [vmem:[#allocation7 + $0x250] sm:$0xff]
    %v165 = vld [vmem:[#allocation7 + $0x258] sm:$0xff]
    %v166 = vld [vmem:[#allocation7 + $0x260] sm:$0xff]
    %v167 = vld [vmem:[#allocation7 + $0x268] sm:$0xff]
    %v168 = vld [vmem:[#allocation7 + $0x270] sm:$0xff]
    %v169 = vld [vmem:[#allocation7 + $0x278] sm:$0xff]
    %v170 = vld [vmem:[#allocation7 + $0x280] sm:$0xff]
    %v171 = vld [vmem:[#allocation7 + $0x288] sm:$0xff]
    %v172 = vld [vmem:[#allocation7 + $0x290] sm:$0xff]
    %v173 = vld [vmem:[#allocation7 + $0x298] sm:$0xff]
    %v174 = vld [vmem:[#allocation7 + $0x2a0] sm:$0xff]
    %v175 = vld [vmem:[#allocation7 + $0x2a8] sm:$0xff]
    %v176 = vld [vmem:[#allocation7 + $0x2b0] sm:$0xff]
    %v177 = vld [vmem:[#allocation7 + $0x2b8] sm:$0xff]
    %v178 = vld [vmem:[#allocation7 + $0x2c0] sm:$0xff]
    %v179 = vld [vmem:[#allocation7 + $0x2c8] sm:$0xff]
    %v180 = vld [vmem:[#allocation7 + $0x2d0] sm:$0xff]
    %v181 = vld [vmem:[#allocation7 + $0x2d8] sm:$0xff]
    %v182 = vld [vmem:[#allocation7 + $0x2e0] sm:$0xff]
    %v183 = vld [vmem:[#allocation7 + $0x2e8] sm:$0xff]
    %v184 = vld [vmem:[#allocation7 + $0x2f0] sm:$0xff]
    %v185 = vld [vmem:[#allocation7 + $0x2f8] sm:$0xff]
    %v186 = vld [vmem:[#allocation7 + $0x300] sm:$0xff]
    %v187 = vld [vmem:[#allocation7 + $0x308] sm:$0xff]
    %v188 = vld [vmem:[#allocation7 + $0x310] sm:$0xff]
    %v189 = vld [vmem:[#allocation7 + $0x318] sm:$0xff]
    %v190 = vld [vmem:[#allocation7 + $0x320] sm:$0xff]
    %v191 = vld [vmem:[#allocation7 + $0x328] sm:$0xff]
    %v192 = vld [vmem:[#allocation7 + $0x330] sm:$0xff]
    %v193 = vld [vmem:[#allocation7 + $0x338] sm:$0xff]
    %v194 = vld [vmem:[#allocation7 + $0x340] sm:$0xff]
    %v195 = vld [vmem:[#allocation7 + $0x348] sm:$0xff]
    %v196 = vld [vmem:[#allocation7 + $0x350] sm:$0xff]
    %v197 = vld [vmem:[#allocation7 + $0x358] sm:$0xff]
    %v198 = vld [vmem:[#allocation7 + $0x360] sm:$0xff]
    %v199 = vld [vmem:[#allocation7 + $0x368] sm:$0xff]
    %v200 = vld [vmem:[#allocation7 + $0x370] sm:$0xff]
    %v201 = vld [vmem:[#allocation7 + $0x378] sm:$0xff]
    %v202 = vld [vmem:[#allocation7 + $0x380] sm:$0xff]
    %v203 = vld [vmem:[#allocation7 + $0x388] sm:$0xff]
    %v204 = vld [vmem:[#allocation7 + $0x390] sm:$0xff]
    %v205 = vld [vmem:[#allocation7 + $0x398] sm:$0xff]
    %v206 = vld [vmem:[#allocation7 + $0x3a0] sm:$0xff]
    %v207 = vld [vmem:[#allocation7 + $0x3a8] sm:$0xff]
    %v208 = vld [vmem:[#allocation7 + $0x3b0] sm:$0xff]
    %v209 = vld [vmem:[#allocation7 + $0x3b8] sm:$0xff]
    %v210 = vld [vmem:[#allocation7 + $0x3c0] sm:$0xff]
    %v211 = vld [vmem:[#allocation7 + $0x3c8] sm:$0xff]
    %v212 = vld [vmem:[#allocation7 + $0x3d0] sm:$0xff]
    %v213 = vld [vmem:[#allocation7 + $0x3d8] sm:$0xff]
    %v214 = vld [vmem:[#allocation7 + $0x3e0] sm:$0xff]
    %v215 = vld [vmem:[#allocation7 + $0x3e8] sm:$0xff]
    %v216 = vld [vmem:[#allocation7 + $0x3f0] sm:$0xff]
    %v217 = vld [vmem:[#allocation7 + $0x3f8] sm:$0xff]
    %v218 = vld [vmem:[#allocation7 + $0x400] sm:$0xff]
    %v219 = vld [vmem:[#allocation7 + $0x408] sm:$0xff]
    %v220 = vld [vmem:[#allocation7 + $0x410] sm:$0xff]
    %v221 = vld [vmem:[#allocation7 + $0x418] sm:$0xff]
    %v222 = vld [vmem:[#allocation7 + $0x420] sm:$0xff]
    %v223 = vld [vmem:[#allocation7 + $0x428] sm:$0xff]
    %v224 = vld [vmem:[#allocation7 + $0x430] sm:$0xff]
    %v225 = vld [vmem:[#allocation7 + $0x438] sm:$0xff]
    %v226 = vld [vmem:[#allocation7 + $0x440] sm:$0xff]
    %v227 = vld [vmem:[#allocation7 + $0x448] sm:$0xff]
    %v228 = vld [vmem:[#allocation7 + $0x450] sm:$0xff]
    %v229 = vld [vmem:[#allocation7 + $0x458] sm:$0xff]
    %v230 = vld [vmem:[#allocation7 + $0x460] sm:$0xff]
    %v231 = vld [vmem:[#allocation7 + $0x468] sm:$0xff]
    %v232 = vld [vmem:[#allocation7 + $0x470] sm:$0xff]
    %v233 = vld [vmem:[#allocation7 + $0x478] sm:$0xff]
    %v234 = vld [vmem:[#allocation7 + $0x480] sm:$0xff]
    %v235 = vld [vmem:[#allocation7 + $0x488] sm:$0xff]
    %v236 = vld [vmem:[#allocation7 + $0x490] sm:$0xff]
    %v237 = vld [vmem:[#allocation7 + $0x498] sm:$0xff]
    %v238 = vld [vmem:[#allocation7 + $0x4a0] sm:$0xff]
    %v239 = vld [vmem:[#allocation7 + $0x4a8] sm:$0xff]
    %v240 = vld [vmem:[#allocation7 + $0x4b0] sm:$0xff]
    %v241 = vld [vmem:[#allocation7 + $0x4b8] sm:$0xff]
    %v242 = vld [vmem:[#allocation7 + $0x4c0] sm:$0xff]
    %v243 = vld [vmem:[#allocation7 + $0x4c8] sm:$0xff]
    %v244 = vld [vmem:[#allocation7 + $0x4d0] sm:$0xff]
    %v245 = vld [vmem:[#allocation7 + $0x4d8] sm:$0xff]
    %v246 = vld [vmem:[#allocation7 + $0x4e0] sm:$0xff]
    %v247 = vld [vmem:[#allocation7 + $0x4e8] sm:$0xff]
    %v248 = vld [vmem:[#allocation7 + $0x4f0] sm:$0xff]
    %v249 = vld [vmem:[#allocation7 + $0x4f8] sm:$0xff]
    %v250 = vld [vmem:[#allocation7 + $0x500] sm:$0xff]
    %v251 = vld [vmem:[#allocation7 + $0x508] sm:$0xff]
    %v252 = vld [vmem:[#allocation7 + $0x510] sm:$0xff]
    %v253 = vld [vmem:[#allocation7 + $0x518] sm:$0xff]
    %v254 = vld [vmem:[#allocation7 + $0x520] sm:$0xff]
    %v255 = vld [vmem:[#allocation7 + $0x528] sm:$0xff]
    %v256 = vld [vmem:[#allocation7 + $0x530] sm:$0xff]
    %v257 = vld [vmem:[#allocation7 + $0x538] sm:$0xff]
    %v258 = vld [vmem:[#allocation7 + $0x540] sm:$0xff]
    %v259 = vld [vmem:[#allocation7 + $0x548] sm:$0xff]
    %v260 = vld [vmem:[#allocation7 + $0x550] sm:$0xff]
    %v261 = vld [vmem:[#allocation7 + $0x558] sm:$0xff]
    %v262 = vld [vmem:[#allocation7 + $0x560] sm:$0xff]
    %v263 = vld [vmem:[#allocation7 + $0x568] sm:$0xff]
    %v264 = vld [vmem:[#allocation7 + $0x570] sm:$0xff]
    %v265 = vld [vmem:[#allocation7 + $0x578] sm:$0xff]
    %v266 = vld [vmem:[#allocation7 + $0x580] sm:$0xff]
    %v267 = vld [vmem:[#allocation7 + $0x588] sm:$0xff]
    %v268 = vld [vmem:[#allocation7 + $0x590] sm:$0xff]
    %v269 = vld [vmem:[#allocation7 + $0x598] sm:$0xff]
    %v270 = vld [vmem:[#allocation7 + $0x5a0] sm:$0xff]
    %v271 = vld [vmem:[#allocation7 + $0x5a8] sm:$0xff]
    %v272 = vld [vmem:[#allocation7 + $0x5b0] sm:$0xff]
    %v273 = vld [vmem:[#allocation7 + $0x5b8] sm:$0xff]
    %v274 = vld [vmem:[#allocation7 + $0x5c0] sm:$0xff]
    %v275 = vld [vmem:[#allocation7 + $0x5c8] sm:$0xff]
    %v276 = vld [vmem:[#allocation7 + $0x5d0] sm:$0xff]
    %v277 = vld [vmem:[#allocation7 + $0x5d8] sm:$0xff]
    %v278 = vld [vmem:[#allocation7 + $0x5e0] sm:$0xff]
    %v279 = vld [vmem:[#allocation7 + $0x5e8] sm:$0xff]
    %v280 = vld [vmem:[#allocation7 + $0x5f0] sm:$0xff]
    %v281 = vld [vmem:[#allocation7 + $0x5f8] sm:$0xff]
    %v474 = vunpack.c.l.b16 %v90
    %v475 = vunpack.c.h.b16 %v90
    %v476 = vunpack.c.l.b16 %v91
    %v477 = vunpack.c.h.b16 %v91
    %v478 = vunpack.c.l.b16 %v92
    %v479 = vunpack.c.h.b16 %v92
    %v480 = vunpack.c.l.b16 %v93
    %v481 = vunpack.c.h.b16 %v93
    %v482 = vunpack.c.l.b16 %v94
    %v483 = vunpack.c.h.b16 %v94
    %v484 = vunpack.c.l.b16 %v95
    %v485 = vunpack.c.h.b16 %v95
    %v486 = vunpack.c.l.b16 %v96
    %v487 = vunpack.c.h.b16 %v96
    %v488 = vunpack.c.l.b16 %v97
    %v489 = vunpack.c.h.b16 %v97
    %v490 = vunpack.c.l.b16 %v98
    %v491 = vunpack.c.h.b16 %v98
    %v492 = vunpack.c.l.b16 %v99
    %v493 = vunpack.c.h.b16 %v99
    %v494 = vunpack.c.l.b16 %v100
    %v495 = vunpack.c.h.b16 %v100
    %v496 = vunpack.c.l.b16 %v101
    %v497 = vunpack.c.h.b16 %v101
    %v498 = vunpack.c.l.b16 %v102
    %v499 = vunpack.c.h.b16 %v102
    %v500 = vunpack.c.l.b16 %v103
    %v501 = vunpack.c.h.b16 %v103
    %v502 = vunpack.c.l.b16 %v104
    %v503 = vunpack.c.h.b16 %v104
    %v504 = vunpack.c.l.b16 %v105
    %v505 = vunpack.c.h.b16 %v105
    %v506 = vunpack.c.l.b16 %v106
    %v507 = vunpack.c.h.b16 %v106
    %v508 = vunpack.c.l.b16 %v107
    %v509 = vunpack.c.h.b16 %v107
    %v510 = vunpack.c.l.b16 %v108
    %v511 = vunpack.c.h.b16 %v108
    %v512 = vunpack.c.l.b16 %v109
    %v513 = vunpack.c.h.b16 %v109
    %v514 = vunpack.c.l.b16 %v110
    %v515 = vunpack.c.h.b16 %v110
    %v516 = vunpack.c.l.b16 %v111
    %v517 = vunpack.c.h.b16 %v111
    %v518 = vunpack.c.l.b16 %v112
    %v519 = vunpack.c.h.b16 %v112
    %v520 = vunpack.c.l.b16 %v113
    %v521 = vunpack.c.h.b16 %v113
    %v522 = vunpack.c.l.b16 %v114
    %v523 = vunpack.c.h.b16 %v114
    %v524 = vunpack.c.l.b16 %v115
    %v525 = vunpack.c.h.b16 %v115
    %v526 = vunpack.c.l.b16 %v116
    %v527 = vunpack.c.h.b16 %v116
    %v528 = vunpack.c.l.b16 %v117
    %v529 = vunpack.c.h.b16 %v117
    %v530 = vunpack.c.l.b16 %v118
    %v531 = vunpack.c.h.b16 %v118
    %v532 = vunpack.c.l.b16 %v119
    %v533 = vunpack.c.h.b16 %v119
    %v534 = vunpack.c.l.b16 %v120
    %v535 = vunpack.c.h.b16 %v120
    %v536 = vunpack.c.l.b16 %v121
    %v537 = vunpack.c.h.b16 %v121
    %v538 = vunpack.c.l.b16 %v122
    %v539 = vunpack.c.h.b16 %v122
    %v540 = vunpack.c.l.b16 %v123
    %v541 = vunpack.c.h.b16 %v123
    %v542 = vunpack.c.l.b16 %v124
    %v543 = vunpack.c.h.b16 %v124
    %v544 = vunpack.c.l.b16 %v125
    %v545 = vunpack.c.h.b16 %v125
    %v546 = vunpack.c.l.b16 %v126
    %v547 = vunpack.c.h.b16 %v126
    %v548 = vunpack.c.l.b16 %v127
    %v549 = vunpack.c.h.b16 %v127
    %v550 = vunpack.c.l.b16 %v128
    %v551 = vunpack.c.h.b16 %v128
    %v552 = vunpack.c.l.b16 %v129
    %v553 = vunpack.c.h.b16 %v129
    %v554 = vunpack.c.l.b16 %v130
    %v555 = vunpack.c.h.b16 %v130
    %v556 = vunpack.c.l.b16 %v131
    %v557 = vunpack.c.h.b16 %v131
    %v558 = vunpack.c.l.b16 %v132
    %v559 = vunpack.c.h.b16 %v132
    %v560 = vunpack.c.l.b16 %v133
    %v561 = vunpack.c.h.b16 %v133
    %v562 = vunpack.c.l.b16 %v134
    %v563 = vunpack.c.h.b16 %v134
    %v564 = vunpack.c.l.b16 %v135
    %v565 = vunpack.c.h.b16 %v135
    %v566 = vunpack.c.l.b16 %v136
    %v567 = vunpack.c.h.b16 %v136
    %v568 = vunpack.c.l.b16 %v137
    %v569 = vunpack.c.h.b16 %v137
    %v570 = vunpack.c.l.b16 %v138
    %v571 = vunpack.c.h.b16 %v138
    %v572 = vunpack.c.l.b16 %v139
    %v573 = vunpack.c.h.b16 %v139
    %v574 = vunpack.c.l.b16 %v140
    %v575 = vunpack.c.h.b16 %v140
    %v576 = vunpack.c.l.b16 %v141
    %v577 = vunpack.c.h.b16 %v141
    %v578 = vunpack.c.l.b16 %v142
    %v579 = vunpack.c.h.b16 %v142
    %v580 = vunpack.c.l.b16 %v143
    %v581 = vunpack.c.h.b16 %v143
    %v582 = vunpack.c.l.b16 %v144
    %v583 = vunpack.c.h.b16 %v144
    %v584 = vunpack.c.l.b16 %v145
    %v585 = vunpack.c.h.b16 %v145
    %v586 = vunpack.c.l.b16 %v146
    %v587 = vunpack.c.h.b16 %v146
    %v588 = vunpack.c.l.b16 %v147
    %v589 = vunpack.c.h.b16 %v147
    %v590 = vunpack.c.l.b16 %v148
    %v591 = vunpack.c.h.b16 %v148
    %v592 = vunpack.c.l.b16 %v149
    %v593 = vunpack.c.h.b16 %v149
    %v594 = vunpack.c.l.b16 %v150
    %v595 = vunpack.c.h.b16 %v150
    %v596 = vunpack.c.l.b16 %v151
    %v597 = vunpack.c.h.b16 %v151
    %v598 = vunpack.c.l.b16 %v152
    %v599 = vunpack.c.h.b16 %v152
    %v600 = vunpack.c.l.b16 %v153
    %v601 = vunpack.c.h.b16 %v153
    %v602 = vunpack.c.l.b16 %v154
    %v603 = vunpack.c.h.b16 %v154
    %v604 = vunpack.c.l.b16 %v155
    %v605 = vunpack.c.h.b16 %v155
    %v606 = vunpack.c.l.b16 %v156
    %v607 = vunpack.c.h.b16 %v156
    %v608 = vunpack.c.l.b16 %v157
    %v609 = vunpack.c.h.b16 %v157
    %v610 = vunpack.c.l.b16 %v158
    %v611 = vunpack.c.h.b16 %v158
    %v612 = vunpack.c.l.b16 %v159
    %v613 = vunpack.c.h.b16 %v159
    %v614 = vunpack.c.l.b16 %v160
    %v615 = vunpack.c.h.b16 %v160
    %v616 = vunpack.c.l.b16 %v161
    %v617 = vunpack.c.h.b16 %v161
    %v618 = vunpack.c.l.b16 %v162
    %v619 = vunpack.c.h.b16 %v162
    %v620 = vunpack.c.l.b16 %v163
    %v621 = vunpack.c.h.b16 %v163
    %v622 = vunpack.c.l.b16 %v164
    %v623 = vunpack.c.h.b16 %v164
    %v624 = vunpack.c.l.b16 %v165
    %v625 = vunpack.c.h.b16 %v165
    %v626 = vunpack.c.l.b16 %v166
    %v627 = vunpack.c.h.b16 %v166
    %v628 = vunpack.c.l.b16 %v167
    %v629 = vunpack.c.h.b16 %v167
    %v630 = vunpack.c.l.b16 %v168
    %v631 = vunpack.c.h.b16 %v168
    %v632 = vunpack.c.l.b16 %v169
    %v633 = vunpack.c.h.b16 %v169
    %v634 = vunpack.c.l.b16 %v170
    %v635 = vunpack.c.h.b16 %v170
    %v636 = vunpack.c.l.b16 %v171
    %v637 = vunpack.c.h.b16 %v171
    %v638 = vunpack.c.l.b16 %v172
    %v639 = vunpack.c.h.b16 %v172
    %v640 = vunpack.c.l.b16 %v173
    %v641 = vunpack.c.h.b16 %v173
    %v642 = vunpack.c.l.b16 %v174
    %v643 = vunpack.c.h.b16 %v174
    %v644 = vunpack.c.l.b16 %v175
    %v645 = vunpack.c.h.b16 %v175
    %v646 = vunpack.c.l.b16 %v176
    %v647 = vunpack.c.h.b16 %v176
    %v648 = vunpack.c.l.b16 %v177
    %v649 = vunpack.c.h.b16 %v177
    %v650 = vunpack.c.l.b16 %v178
    %v651 = vunpack.c.h.b16 %v178
    %v652 = vunpack.c.l.b16 %v179
    %v653 = vunpack.c.h.b16 %v179
    %v654 = vunpack.c.l.b16 %v180
    %v655 = vunpack.c.h.b16 %v180
    %v656 = vunpack.c.l.b16 %v181
    %v657 = vunpack.c.h.b16 %v181
    %v658 = vunpack.c.l.b16 %v182
    %v659 = vunpack.c.h.b16 %v182
    %v660 = vunpack.c.l.b16 %v183
    %v661 = vunpack.c.h.b16 %v183
    %v662 = vunpack.c.l.b16 %v184
    %v663 = vunpack.c.h.b16 %v184
    %v664 = vunpack.c.l.b16 %v185
    %v665 = vunpack.c.h.b16 %v185
    %v666 = vunpack.c.l.b16 %v186
    %v667 = vunpack.c.h.b16 %v186
    %v668 = vunpack.c.l.b16 %v187
    %v669 = vunpack.c.h.b16 %v187
    %v670 = vunpack.c.l.b16 %v188
    %v671 = vunpack.c.h.b16 %v188
    %v672 = vunpack.c.l.b16 %v189
    %v673 = vunpack.c.h.b16 %v189
    %v674 = vunpack.c.l.b16 %v190
    %v675 = vunpack.c.h.b16 %v190
    %v676 = vunpack.c.l.b16 %v191
    %v677 = vunpack.c.h.b16 %v191
    %v678 = vunpack.c.l.b16 %v192
    %v679 = vunpack.c.h.b16 %v192
    %v680 = vunpack.c.l.b16 %v193
    %v681 = vunpack.c.h.b16 %v193
    %v682 = vunpack.c.l.b16 %v194
    %v683 = vunpack.c.h.b16 %v194
    %v684 = vunpack.c.l.b16 %v195
    %v685 = vunpack.c.h.b16 %v195
    %v686 = vunpack.c.l.b16 %v196
    %v687 = vunpack.c.h.b16 %v196
    %v688 = vunpack.c.l.b16 %v197
    %v689 = vunpack.c.h.b16 %v197
    %v690 = vunpack.c.l.b16 %v198
    %v691 = vunpack.c.h.b16 %v198
    %v692 = vunpack.c.l.b16 %v199
    %v693 = vunpack.c.h.b16 %v199
    %v694 = vunpack.c.l.b16 %v200
    %v695 = vunpack.c.h.b16 %v200
    %v696 = vunpack.c.l.b16 %v201
    %v697 = vunpack.c.h.b16 %v201
    %v698 = vunpack.c.l.b16 %v202
    %v699 = vunpack.c.h.b16 %v202
    %v700 = vunpack.c.l.b16 %v203
    %v701 = vunpack.c.h.b16 %v203
    %v702 = vunpack.c.l.b16 %v204
    %v703 = vunpack.c.h.b16 %v204
    %v704 = vunpack.c.l.b16 %v205
    %v705 = vunpack.c.h.b16 %v205
    %v706 = vunpack.c.l.b16 %v206
    %v707 = vunpack.c.h.b16 %v206
    %v708 = vunpack.c.l.b16 %v207
    %v709 = vunpack.c.h.b16 %v207
    %v710 = vunpack.c.l.b16 %v208
    %v711 = vunpack.c.h.b16 %v208
    %v712 = vunpack.c.l.b16 %v209
    %v713 = vunpack.c.h.b16 %v209
    %v714 = vunpack.c.l.b16 %v210
    %v715 = vunpack.c.h.b16 %v210
    %v716 = vunpack.c.l.b16 %v211
    %v717 = vunpack.c.h.b16 %v211
    %v718 = vunpack.c.l.b16 %v212
    %v719 = vunpack.c.h.b16 %v212
    %v720 = vunpack.c.l.b16 %v213
    %v721 = vunpack.c.h.b16 %v213
    %v722 = vunpack.c.l.b16 %v214
    %v723 = vunpack.c.h.b16 %v214
    %v724 = vunpack.c.l.b16 %v215
    %v725 = vunpack.c.h.b16 %v215
    %v726 = vunpack.c.l.b16 %v216
    %v727 = vunpack.c.h.b16 %v216
    %v728 = vunpack.c.l.b16 %v217
    %v729 = vunpack.c.h.b16 %v217
    %v730 = vunpack.c.l.b16 %v218
    %v731 = vunpack.c.h.b16 %v218
    %v732 = vunpack.c.l.b16 %v219
    %v733 = vunpack.c.h.b16 %v219
    %v734 = vunpack.c.l.b16 %v220
    %v735 = vunpack.c.h.b16 %v220
    %v736 = vunpack.c.l.b16 %v221
    %v737 = vunpack.c.h.b16 %v221
    %v738 = vunpack.c.l.b16 %v222
    %v739 = vunpack.c.h.b16 %v222
    %v740 = vunpack.c.l.b16 %v223
    %v741 = vunpack.c.h.b16 %v223
    %v742 = vunpack.c.l.b16 %v224
    %v743 = vunpack.c.h.b16 %v224
    %v744 = vunpack.c.l.b16 %v225
    %v745 = vunpack.c.h.b16 %v225
    %v746 = vunpack.c.l.b16 %v226
    %v747 = vunpack.c.h.b16 %v226
    %v748 = vunpack.c.l.b16 %v227
    %v749 = vunpack.c.h.b16 %v227
    %v750 = vunpack.c.l.b16 %v228
    %v751 = vunpack.c.h.b16 %v228
    %v752 = vunpack.c.l.b16 %v229
    %v753 = vunpack.c.h.b16 %v229
    %v754 = vunpack.c.l.b16 %v230
    %v755 = vunpack.c.h.b16 %v230
    %v756 = vunpack.c.l.b16 %v231
    %v757 = vunpack.c.h.b16 %v231
    %v758 = vunpack.c.l.b16 %v232
    %v759 = vunpack.c.h.b16 %v232
    %v760 = vunpack.c.l.b16 %v233
    %v761 = vunpack.c.h.b16 %v233
    %v762 = vunpack.c.l.b16 %v234
    %v763 = vunpack.c.h.b16 %v234
    %v764 = vunpack.c.l.b16 %v235
    %v765 = vunpack.c.h.b16 %v235
    %v766 = vunpack.c.l.b16 %v236
    %v767 = vunpack.c.h.b16 %v236
    %v768 = vunpack.c.l.b16 %v237
    %v769 = vunpack.c.h.b16 %v237
    %v770 = vunpack.c.l.b16 %v238
    %v771 = vunpack.c.h.b16 %v238
    %v772 = vunpack.c.l.b16 %v239
    %v773 = vunpack.c.h.b16 %v239
    %v774 = vunpack.c.l.b16 %v240
    %v775 = vunpack.c.h.b16 %v240
    %v776 = vunpack.c.l.b16 %v241
    %v777 = vunpack.c.h.b16 %v241
    %v778 = vunpack.c.l.b16 %v242
    %v779 = vunpack.c.h.b16 %v242
    %v780 = vunpack.c.l.b16 %v243
    %v781 = vunpack.c.h.b16 %v243
    %v782 = vunpack.c.l.b16 %v244
    %v783 = vunpack.c.h.b16 %v244
    %v784 = vunpack.c.l.b16 %v245
    %v785 = vunpack.c.h.b16 %v245
    %v786 = vunpack.c.l.b16 %v246
    %v787 = vunpack.c.h.b16 %v246
    %v788 = vunpack.c.l.b16 %v247
    %v789 = vunpack.c.h.b16 %v247
    %v790 = vunpack.c.l.b16 %v248
    %v791 = vunpack.c.h.b16 %v248
    %v792 = vunpack.c.l.b16 %v249
    %v793 = vunpack.c.h.b16 %v249
    %v794 = vunpack.c.l.b16 %v250
    %v795 = vunpack.c.h.b16 %v250
    %v796 = vunpack.c.l.b16 %v251
    %v797 = vunpack.c.h.b16 %v251
    %v798 = vunpack.c.l.b16 %v252
    %v799 = vunpack.c.h.b16 %v252
    %v800 = vunpack.c.l.b16 %v253
    %v801 = vunpack.c.h.b16 %v253
    %v802 = vunpack.c.l.b16 %v254
    %v803 = vunpack.c.h.b16 %v254
    %v804 = vunpack.c.l.b16 %v255
    %v805 = vunpack.c.h.b16 %v255
    %v806 = vunpack.c.l.b16 %v256
    %v807 = vunpack.c.h.b16 %v256
    %v808 = vunpack.c.l.b16 %v257
    %v809 = vunpack.c.h.b16 %v257
    %v810 = vunpack.c.l.b16 %v258
    %v811 = vunpack.c.h.b16 %v258
    %v812 = vunpack.c.l.b16 %v259
    %v813 = vunpack.c.h.b16 %v259
    %v814 = vunpack.c.l.b16 %v260
    %v815 = vunpack.c.h.b16 %v260
    %v816 = vunpack.c.l.b16 %v261
    %v817 = vunpack.c.h.b16 %v261
    %v818 = vunpack.c.l.b16 %v262
    %v819 = vunpack.c.h.b16 %v262
    %v820 = vunpack.c.l.b16 %v263
    %v821 = vunpack.c.h.b16 %v263
    %v822 = vunpack.c.l.b16 %v264
    %v823 = vunpack.c.h.b16 %v264
    %v824 = vunpack.c.l.b16 %v265
    %v825 = vunpack.c.h.b16 %v265
    %v826 = vunpack.c.l.b16 %v266
    %v827 = vunpack.c.h.b16 %v266
    %v828 = vunpack.c.l.b16 %v267
    %v829 = vunpack.c.h.b16 %v267
    %v830 = vunpack.c.l.b16 %v268
    %v831 = vunpack.c.h.b16 %v268
    %v832 = vunpack.c.l.b16 %v269
    %v833 = vunpack.c.h.b16 %v269
    %v834 = vunpack.c.l.b16 %v270
    %v835 = vunpack.c.h.b16 %v270
    %v836 = vunpack.c.l.b16 %v271
    %v837 = vunpack.c.h.b16 %v271
    %v838 = vunpack.c.l.b16 %v272
    %v839 = vunpack.c.h.b16 %v272
    %v840 = vunpack.c.l.b16 %v273
    %v841 = vunpack.c.h.b16 %v273
    %v842 = vunpack.c.l.b16 %v274
    %v843 = vunpack.c.h.b16 %v274
    %v844 = vunpack.c.l.b16 %v275
    %v845 = vunpack.c.h.b16 %v275
    %v846 = vunpack.c.l.b16 %v276
    %v847 = vunpack.c.h.b16 %v276
    %v848 = vunpack.c.l.b16 %v277
    %v849 = vunpack.c.h.b16 %v277
    %v850 = vunpack.c.l.b16 %v278
    %v851 = vunpack.c.h.b16 %v278
    %v852 = vunpack.c.l.b16 %v279
    %v853 = vunpack.c.h.b16 %v279
    %v854 = vunpack.c.l.b16 %v280
    %v855 = vunpack.c.h.b16 %v280
    %v856 = vunpack.c.l.b16 %v281
    %v857 = vunpack.c.h.b16 %v281
    %v858 = vpack.c.b16 %v478, %v474
    %v859 = vpack.c.b16 %v479, %v475
    %v860 = vpack.c.b16 %v480, %v476
    %v861 = vpack.c.b16 %v481, %v477
    %v862 = vpack.c.b16 %v486, %v482
    %v863 = vpack.c.b16 %v487, %v483
    %v864 = vpack.c.b16 %v488, %v484
    %v865 = vpack.c.b16 %v489, %v485
    %v866 = vpack.c.b16 %v494, %v490
    %v867 = vpack.c.b16 %v495, %v491
    %v868 = vpack.c.b16 %v496, %v492
    %v869 = vpack.c.b16 %v497, %v493
    %v870 = vpack.c.b16 %v502, %v498
    %v871 = vpack.c.b16 %v503, %v499
    %v872 = vpack.c.b16 %v504, %v500
    %v873 = vpack.c.b16 %v505, %v501
    %v874 = vpack.c.b16 %v510, %v506
    %v875 = vpack.c.b16 %v511, %v507
    %v876 = vpack.c.b16 %v512, %v508
    %v877 = vpack.c.b16 %v513, %v509
    %v878 = vpack.c.b16 %v518, %v514
    %v879 = vpack.c.b16 %v519, %v515
    %v880 = vpack.c.b16 %v520, %v516
    %v881 = vpack.c.b16 %v521, %v517
    %v882 = vpack.c.b16 %v526, %v522
    %v883 = vpack.c.b16 %v527, %v523
    %v884 = vpack.c.b16 %v528, %v524
    %v885 = vpack.c.b16 %v529, %v525
    %v886 = vpack.c.b16 %v534, %v530
    %v887 = vpack.c.b16 %v535, %v531
    %v888 = vpack.c.b16 %v536, %v532
    %v889 = vpack.c.b16 %v537, %v533
    %v890 = vpack.c.b16 %v542, %v538
    %v891 = vpack.c.b16 %v543, %v539
    %v892 = vpack.c.b16 %v544, %v540
    %v893 = vpack.c.b16 %v545, %v541
    %v894 = vpack.c.b16 %v550, %v546
    %v895 = vpack.c.b16 %v551, %v547
    %v896 = vpack.c.b16 %v552, %v548
    %v897 = vpack.c.b16 %v553, %v549
    %v898 = vpack.c.b16 %v558, %v554
    %v899 = vpack.c.b16 %v559, %v555
    %v900 = vpack.c.b16 %v560, %v556
    %v901 = vpack.c.b16 %v561, %v557
    %v902 = vpack.c.b16 %v566, %v562
    %v903 = vpack.c.b16 %v567, %v563
    %v904 = vpack.c.b16 %v568, %v564
    %v905 = vpack.c.b16 %v569, %v565
    %v906 = vpack.c.b16 %v574, %v570
    %v907 = vpack.c.b16 %v575, %v571
    %v908 = vpack.c.b16 %v576, %v572
    %v909 = vpack.c.b16 %v577, %v573
    %v910 = vpack.c.b16 %v582, %v578
    %v911 = vpack.c.b16 %v583, %v579
    %v912 = vpack.c.b16 %v584, %v580
    %v913 = vpack.c.b16 %v585, %v581
    %v914 = vpack.c.b16 %v590, %v586
    %v915 = vpack.c.b16 %v591, %v587
    %v916 = vpack.c.b16 %v592, %v588
    %v917 = vpack.c.b16 %v593, %v589
    %v918 = vpack.c.b16 %v598, %v594
    %v919 = vpack.c.b16 %v599, %v595
    %v920 = vpack.c.b16 %v600, %v596
    %v921 = vpack.c.b16 %v601, %v597
    %v922 = vpack.c.b16 %v606, %v602
    %v923 = vpack.c.b16 %v607, %v603
    %v924 = vpack.c.b16 %v608, %v604
    %v925 = vpack.c.b16 %v609, %v605
    %v926 = vpack.c.b16 %v614, %v610
    %v927 = vpack.c.b16 %v615, %v611
    %v928 = vpack.c.b16 %v616, %v612
    %v929 = vpack.c.b16 %v617, %v613
    %v930 = vpack.c.b16 %v622, %v618
    %v931 = vpack.c.b16 %v623, %v619
    %v932 = vpack.c.b16 %v624, %v620
    %v933 = vpack.c.b16 %v625, %v621
    %v934 = vpack.c.b16 %v630, %v626
    %v935 = vpack.c.b16 %v631, %v627
    %v936 = vpack.c.b16 %v632, %v628
    %v937 = vpack.c.b16 %v633, %v629
    %v938 = vpack.c.b16 %v638, %v634
    %v939 = vpack.c.b16 %v639, %v635
    %v940 = vpack.c.b16 %v640, %v636
    %v941 = vpack.c.b16 %v641, %v637
    %v942 = vpack.c.b16 %v646, %v642
    %v943 = vpack.c.b16 %v647, %v643
    %v944 = vpack.c.b16 %v648, %v644
    %v945 = vpack.c.b16 %v649, %v645
    %v946 = vpack.c.b16 %v654, %v650
    %v947 = vpack.c.b16 %v655, %v651
    %v948 = vpack.c.b16 %v656, %v652
    %v949 = vpack.c.b16 %v657, %v653
    %v950 = vpack.c.b16 %v662, %v658
    %v951 = vpack.c.b16 %v663, %v659
    %v952 = vpack.c.b16 %v664, %v660
    %v953 = vpack.c.b16 %v665, %v661
    %v954 = vpack.c.b16 %v670, %v666
    %v955 = vpack.c.b16 %v671, %v667
    %v956 = vpack.c.b16 %v672, %v668
    %v957 = vpack.c.b16 %v673, %v669
    %v958 = vpack.c.b16 %v678, %v674
    %v959 = vpack.c.b16 %v679, %v675
    %v960 = vpack.c.b16 %v680, %v676
    %v961 = vpack.c.b16 %v681, %v677
    %v962 = vpack.c.b16 %v686, %v682
    %v963 = vpack.c.b16 %v687, %v683
    %v964 = vpack.c.b16 %v688, %v684
    %v965 = vpack.c.b16 %v689, %v685
    %v966 = vpack.c.b16 %v694, %v690
    %v967 = vpack.c.b16 %v695, %v691
    %v968 = vpack.c.b16 %v696, %v692
    %v969 = vpack.c.b16 %v697, %v693
    %v970 = vpack.c.b16 %v702, %v698
    %v971 = vpack.c.b16 %v703, %v699
    %v972 = vpack.c.b16 %v704, %v700
    %v973 = vpack.c.b16 %v705, %v701
    %v974 = vpack.c.b16 %v710, %v706
    %v975 = vpack.c.b16 %v711, %v707
    %v976 = vpack.c.b16 %v712, %v708
    %v977 = vpack.c.b16 %v713, %v709
    %v978 = vpack.c.b16 %v718, %v714
    %v979 = vpack.c.b16 %v719, %v715
    %v980 = vpack.c.b16 %v720, %v716
    %v981 = vpack.c.b16 %v721, %v717
    %v982 = vpack.c.b16 %v726, %v722
    %v983 = vpack.c.b16 %v727, %v723
    %v984 = vpack.c.b16 %v728, %v724
    %v985 = vpack.c.b16 %v729, %v725
    %v986 = vpack.c.b16 %v734, %v730
    %v987 = vpack.c.b16 %v735, %v731
    %v988 = vpack.c.b16 %v736, %v732
    %v989 = vpack.c.b16 %v737, %v733
    %v990 = vpack.c.b16 %v742, %v738
    %v991 = vpack.c.b16 %v743, %v739
    %v992 = vpack.c.b16 %v744, %v740
    %v993 = vpack.c.b16 %v745, %v741
    %v994 = vpack.c.b16 %v750, %v746
    %v995 = vpack.c.b16 %v751, %v747
    %v996 = vpack.c.b16 %v752, %v748
    %v997 = vpack.c.b16 %v753, %v749
    %v998 = vpack.c.b16 %v758, %v754
    %v999 = vpack.c.b16 %v759, %v755
    %v1000 = vpack.c.b16 %v760, %v756
    %v1001 = vpack.c.b16 %v761, %v757
    %v1002 = vpack.c.b16 %v766, %v762
    %v1003 = vpack.c.b16 %v767, %v763
    %v1004 = vpack.c.b16 %v768, %v764
    %v1005 = vpack.c.b16 %v769, %v765
    %v1006 = vpack.c.b16 %v774, %v770
    %v1007 = vpack.c.b16 %v775, %v771
    %v1008 = vpack.c.b16 %v776, %v772
    %v1009 = vpack.c.b16 %v777, %v773
    %v1010 = vpack.c.b16 %v782, %v778
    %v1011 = vpack.c.b16 %v783, %v779
    %v1012 = vpack.c.b16 %v784, %v780
    %v1013 = vpack.c.b16 %v785, %v781
    %v1014 = vpack.c.b16 %v790, %v786
    %v1015 = vpack.c.b16 %v791, %v787
    %v1016 = vpack.c.b16 %v792, %v788
    %v1017 = vpack.c.b16 %v793, %v789
    %v1018 = vpack.c.b16 %v798, %v794
    %v1019 = vpack.c.b16 %v799, %v795
    %v1020 = vpack.c.b16 %v800, %v796
    %v1021 = vpack.c.b16 %v801, %v797
    %v1022 = vpack.c.b16 %v806, %v802
    %v1023 = vpack.c.b16 %v807, %v803
    %v1024 = vpack.c.b16 %v808, %v804
    %v1025 = vpack.c.b16 %v809, %v805
    %v1026 = vpack.c.b16 %v814, %v810
    %v1027 = vpack.c.b16 %v815, %v811
    %v1028 = vpack.c.b16 %v816, %v812
    %v1029 = vpack.c.b16 %v817, %v813
    %v1030 = vpack.c.b16 %v822, %v818
    %v1031 = vpack.c.b16 %v823, %v819
    %v1032 = vpack.c.b16 %v824, %v820
    %v1033 = vpack.c.b16 %v825, %v821
    %v1034 = vpack.c.b16 %v830, %v826
    %v1035 = vpack.c.b16 %v831, %v827
    %v1036 = vpack.c.b16 %v832, %v828
    %v1037 = vpack.c.b16 %v833, %v829
    %v1038 = vpack.c.b16 %v838, %v834
    %v1039 = vpack.c.b16 %v839, %v835
    %v1040 = vpack.c.b16 %v840, %v836
    %v1041 = vpack.c.b16 %v841, %v837
    %v1042 = vpack.c.b16 %v846, %v842
    %v1043 = vpack.c.b16 %v847, %v843
    %v1044 = vpack.c.b16 %v848, %v844
    %v1045 = vpack.c.b16 %v849, %v845
    %v1046 = vpack.c.b16 %v854, %v850
    %v1047 = vpack.c.b16 %v855, %v851
    %v1048 = vpack.c.b16 %v856, %v852
    %v1049 = vpack.c.b16 %v857, %v853
    %1242 = vmatprep.subr.bf16.mxu0 %v887
    %1243 = vmatpush1.bf16.msra.mxu0 %v886
    %1244 = vmatprep.subr.bf16.mxu0 %v883
    %1245 = vmatpush1.bf16.msra.mxu0 %v882
    %1246 = vmatprep.subr.bf16.mxu0 %v879
    %1247 = vmatpush1.bf16.msra.mxu0 %v878
    %1248 = vmatprep.subr.bf16.mxu0 %v875
    %1249 = vmatpush1.bf16.msra.mxu0 %v874
    %1250 = vmatprep.subr.bf16.mxu0 %v871
    %1251 = vmatpush1.bf16.msra.mxu0 %v870
    %1252 = vmatprep.subr.bf16.mxu0 %v867
    %1253 = vmatpush1.bf16.msra.mxu0 %v866
    %1254 = vmatprep.subr.bf16.mxu0 %v863
    %1255 = vmatpush1.bf16.msra.mxu0 %v862
    %1256 = vmatprep.subr.bf16.mxu0 %v859
    %1257 = vmatpush1.bf16.msra.mxu0 %v858
    %1258 = vmatprep.subr.bf16.mxu0 %v919
    %1259 = vmatpush2.bf16.msra.mxu0 %v918
    %1260 = vmatprep.subr.bf16.mxu0 %v915
    %1261 = vmatpush2.bf16.msra.mxu0 %v914
    %1262 = vmatprep.subr.bf16.mxu0 %v911
    %1263 = vmatpush2.bf16.msra.mxu0 %v910
    %1264 = vmatprep.subr.bf16.mxu0 %v907
    %1265 = vmatpush2.bf16.msra.mxu0 %v906
    %1266 = vmatprep.subr.bf16.mxu0 %v903
    %1267 = vmatpush2.bf16.msra.mxu0 %v902
    %1268 = vmatprep.subr.bf16.mxu0 %v899
    %1269 = vmatpush2.bf16.msra.mxu0 %v898
    %1270 = vmatprep.subr.bf16.mxu0 %v895
    %1271 = vmatpush2.bf16.msra.mxu0 %v894
    %1272 = vmatprep.subr.bf16.mxu0 %v891
    %1273 = vmatpush2.bf16.msra.mxu0 %v890
    %1274 = vmatprep.mubr.bf16.mxu0 %v83
    %1275 = vmatmul.mubr.bf16.gmra.mxu0 %v82
    %v1276 = vpop.f32.mrf.mxu0
    %v1277 = vadd.f32 0.0, %v1276
    %v1278 = vpop.f32.mrf.mxu0
    %v1279 = vadd.f32 0.0, %v1278
    %v1280 = vpop.f32.mrf.mxu0
    %v1281 = vpop.f32.mrf.mxu0
    %1282 = vdwg.mxu0
    %1283 = vmatprep.subr.bf16.mxu0 %v951
    %1284 = vmatpush1.bf16.msra.mxu0 %v950
    %1285 = vmatprep.subr.bf16.mxu0 %v947
    %1286 = vmatpush1.bf16.msra.mxu0 %v946
    %1287 = vmatprep.subr.bf16.mxu0 %v943
    %1288 = vmatpush1.bf16.msra.mxu0 %v942
    %1289 = vmatprep.subr.bf16.mxu0 %v939
    %1290 = vmatpush1.bf16.msra.mxu0 %v938
    %1291 = vmatprep.subr.bf16.mxu0 %v935
    %1292 = vmatpush1.bf16.msra.mxu0 %v934
    %1293 = vmatprep.subr.bf16.mxu0 %v931
    %1294 = vmatpush1.bf16.msra.mxu0 %v930
    %1295 = vmatprep.subr.bf16.mxu0 %v927
    %1296 = vmatpush1.bf16.msra.mxu0 %v926
    %1297 = vmatprep.subr.bf16.mxu0 %v923
    %1298 = vmatpush1.bf16.msra.mxu0 %v922
    %1299 = vmatprep.subr.bf16.mxu0 %v983
    %1300 = vmatpush2.bf16.msra.mxu0 %v982
    %1301 = vmatprep.subr.bf16.mxu0 %v979
    %1302 = vmatpush2.bf16.msra.mxu0 %v978
    %1303 = vmatprep.subr.bf16.mxu0 %v975
    %1304 = vmatpush2.bf16.msra.mxu0 %v974
    %1305 = vmatprep.subr.bf16.mxu0 %v971
    %1306 = vmatpush2.bf16.msra.mxu0 %v970
    %1307 = vmatprep.subr.bf16.mxu0 %v967
    %1308 = vmatpush2.bf16.msra.mxu0 %v966
    %1309 = vmatprep.subr.bf16.mxu0 %v963
    %1310 = vmatpush2.bf16.msra.mxu0 %v962
    %1311 = vmatprep.subr.bf16.mxu0 %v959
    %1312 = vmatpush2.bf16.msra.mxu0 %v958
    %1313 = vmatprep.subr.bf16.mxu0 %v955
    %1314 = vmatpush2.bf16.msra.mxu0 %v954
    %1315 = vmatprep.mubr.bf16.mxu0 %v85
    %1316 = vmatmul.mubr.bf16.gmra.mxu0 %v84
    %v1317 = vpop.f32.mrf.mxu0
    %v1318 = vadd.f32 %v1277, %v1317
    %v1319 = vpop.f32.mrf.mxu0
    %v1320 = vadd.f32 %v1279, %v1319
    %v1321 = vpop.f32.mrf.mxu0
    %v1322 = vpop.f32.mrf.mxu0
    %1323 = vdwg.mxu0
    %1324 = vmatprep.subr.bf16.mxu0 %v1015
    %1325 = vmatpush1.bf16.msra.mxu0 %v1014
    %1326 = vmatprep.subr.bf16.mxu0 %v1011
    %1327 = vmatpush1.bf16.msra.mxu0 %v1010
    %1328 = vmatprep.subr.bf16.mxu0 %v1007
    %1329 = vmatpush1.bf16.msra.mxu0 %v1006
    %1330 = vmatprep.subr.bf16.mxu0 %v1003
    %1331 = vmatpush1.bf16.msra.mxu0 %v1002
    %1332 = vmatprep.subr.bf16.mxu0 %v999
    %1333 = vmatpush1.bf16.msra.mxu0 %v998
    %1334 = vmatprep.subr.bf16.mxu0 %v995
    %1335 = vmatpush1.bf16.msra.mxu0 %v994
    %1336 = vmatprep.subr.bf16.mxu0 %v991
    %1337 = vmatpush1.bf16.msra.mxu0 %v990
    %1338 = vmatprep.subr.bf16.mxu0 %v987
    %1339 = vmatpush1.bf16.msra.mxu0 %v986
    %1340 = vmatprep.subr.bf16.mxu0 %v1047
    %1341 = vmatpush2.bf16.msra.mxu0 %v1046
    %1342 = vmatprep.subr.bf16.mxu0 %v1043
    %1343 = vmatpush2.bf16.msra.mxu0 %v1042
    %1344 = vmatprep.subr.bf16.mxu0 %v1039
    %1345 = vmatpush2.bf16.msra.mxu0 %v1038
    %1346 = vmatprep.subr.bf16.mxu0 %v1035
    %1347 = vmatpush2.bf16.msra.mxu0 %v1034
    %1348 = vmatprep.subr.bf16.mxu0 %v1031
    %1349 = vmatpush2.bf16.msra.mxu0 %v1030
    %1350 = vmatprep.subr.bf16.mxu0 %v1027
    %1351 = vmatpush2.bf16.msra.mxu0 %v1026
    %1352 = vmatprep.subr.bf16.mxu0 %v1023
    %1353 = vmatpush2.bf16.msra.mxu0 %v1022
    %1354 = vmatprep.subr.bf16.mxu0 %v1019
    %1355 = vmatpush2.bf16.msra.mxu0 %v1018
    %1356 = vmatprep.mubr.bf16.mxu0 %v87
    %1357 = vmatmul.mubr.bf16.gmra.mxu0 %v86
    %v1358 = vpop.f32.mrf.mxu0
    %v1359 = vadd.f32 %v1318, %v1358
    %v1360 = vpop.f32.mrf.mxu0
    %v1361 = vadd.f32 %v1320, %v1360
    %v1362 = vpop.f32.mrf.mxu0
    %v1363 = vpop.f32.mrf.mxu0
    %1364 = vdwg.mxu0
    %1365 = vmatprep.subr.bf16.mxu0 %v889
    %1366 = vmatpush1.bf16.msra.mxu0 %v888
    %1367 = vmatprep.subr.bf16.mxu0 %v885
    %1368 = vmatpush1.bf16.msra.mxu0 %v884
    %1369 = vmatprep.subr.bf16.mxu0 %v881
    %1370 = vmatpush1.bf16.msra.mxu0 %v880
    %1371 = vmatprep.subr.bf16.mxu0 %v877
    %1372 = vmatpush1.bf16.msra.mxu0 %v876
    %1373 = vmatprep.subr.bf16.mxu0 %v873
    %1374 = vmatpush1.bf16.msra.mxu0 %v872
    %1375 = vmatprep.subr.bf16.mxu0 %v869
    %1376 = vmatpush1.bf16.msra.mxu0 %v868
    %1377 = vmatprep.subr.bf16.mxu0 %v865
    %1378 = vmatpush1.bf16.msra.mxu0 %v864
    %1379 = vmatprep.subr.bf16.mxu0 %v861
    %1380 = vmatpush1.bf16.msra.mxu0 %v860
    %1381 = vmatprep.subr.bf16.mxu0 %v921
    %1382 = vmatpush2.bf16.msra.mxu0 %v920
    %1383 = vmatprep.subr.bf16.mxu0 %v917
    %1384 = vmatpush2.bf16.msra.mxu0 %v916
    %1385 = vmatprep.subr.bf16.mxu0 %v913
    %1386 = vmatpush2.bf16.msra.mxu0 %v912
    %1387 = vmatprep.subr.bf16.mxu0 %v909
    %1388 = vmatpush2.bf16.msra.mxu0 %v908
    %1389 = vmatprep.subr.bf16.mxu0 %v905
    %1390 = vmatpush2.bf16.msra.mxu0 %v904
    %1391 = vmatprep.subr.bf16.mxu0 %v901
    %1392 = vmatpush2.bf16.msra.mxu0 %v900
    %1393 = vmatprep.subr.bf16.mxu0 %v897
    %1394 = vmatpush2.bf16.msra.mxu0 %v896
    %1395 = vmatprep.subr.bf16.mxu0 %v893
    %1396 = vmatpush2.bf16.msra.mxu0 %v892
    %1397 = vmatprep.mubr.bf16.mxu0 %v83
    %1398 = vmatmul.mubr.bf16.gmra.mxu0 %v82
    %v1399 = vpop.f32.mrf.mxu0
    %v1400 = vadd.f32 0.0, %v1399
    %v1401 = vpop.f32.mrf.mxu0
    %v1402 = vadd.f32 0.0, %v1401
    %v1403 = vpop.f32.mrf.mxu0
    %v1404 = vpop.f32.mrf.mxu0
    %1405 = vdwg.mxu0
    %1406 = vmatprep.subr.bf16.mxu0 %v953
    %1407 = vmatpush1.bf16.msra.mxu0 %v952
    %1408 = vmatprep.subr.bf16.mxu0 %v949
    %1409 = vmatpush1.bf16.msra.mxu0 %v948
    %1410 = vmatprep.subr.bf16.mxu0 %v945
    %1411 = vmatpush1.bf16.msra.mxu0 %v944
    %1412 = vmatprep.subr.bf16.mxu0 %v941
    %1413 = vmatpush1.bf16.msra.mxu0 %v940
    %1414 = vmatprep.subr.bf16.mxu0 %v937
    %1415 = vmatpush1.bf16.msra.mxu0 %v936
    %1416 = vmatprep.subr.bf16.mxu0 %v933
    %1417 = vmatpush1.bf16.msra.mxu0 %v932
    %1418 = vmatprep.subr.bf16.mxu0 %v929
    %1419 = vmatpush1.bf16.msra.mxu0 %v928
    %1420 = vmatprep.subr.bf16.mxu0 %v925
    %1421 = vmatpush1.bf16.msra.mxu0 %v924
    %1422 = vmatprep.subr.bf16.mxu0 %v985
    %1423 = vmatpush2.bf16.msra.mxu0 %v984
    %1424 = vmatprep.subr.bf16.mxu0 %v981
    %1425 = vmatpush2.bf16.msra.mxu0 %v980
    %1426 = vmatprep.subr.bf16.mxu0 %v977
    %1427 = vmatpush2.bf16.msra.mxu0 %v976
    %1428 = vmatprep.subr.bf16.mxu0 %v973
    %1429 = vmatpush2.bf16.msra.mxu0 %v972
    %1430 = vmatprep.subr.bf16.mxu0 %v969
    %1431 = vmatpush2.bf16.msra.mxu0 %v968
    %1432 = vmatprep.subr.bf16.mxu0 %v965
    %1433 = vmatpush2.bf16.msra.mxu0 %v964
    %1434 = vmatprep.subr.bf16.mxu0 %v961
    %1435 = vmatpush2.bf16.msra.mxu0 %v960
    %1436 = vmatprep.subr.bf16.mxu0 %v957
    %1437 = vmatpush2.bf16.msra.mxu0 %v956
    %1438 = vmatprep.mubr.bf16.mxu0 %v85
    %1439 = vmatmul.mubr.bf16.gmra.mxu0 %v84
    %v1440 = vpop.f32.mrf.mxu0
    %v1441 = vadd.f32 %v1400, %v1440
    %v1442 = vpop.f32.mrf.mxu0
    %v1443 = vadd.f32 %v1402, %v1442
    %v1444 = vpop.f32.mrf.mxu0
    %v1445 = vpop.f32.mrf.mxu0
    %1446 = vdwg.mxu0
    %1447 = vmatprep.subr.bf16.mxu0 %v1017
    %1448 = vmatpush1.bf16.msra.mxu0 %v1016
    %1449 = vmatprep.subr.bf16.mxu0 %v1013
    %1450 = vmatpush1.bf16.msra.mxu0 %v1012
    %1451 = vmatprep.subr.bf16.mxu0 %v1009
    %1452 = vmatpush1.bf16.msra.mxu0 %v1008
    %1453 = vmatprep.subr.bf16.mxu0 %v1005
    %1454 = vmatpush1.bf16.msra.mxu0 %v1004
    %1455 = vmatprep.subr.bf16.mxu0 %v1001
    %1456 = vmatpush1.bf16.msra.mxu0 %v1000
    %1457 = vmatprep.subr.bf16.mxu0 %v997
    %1458 = vmatpush1.bf16.msra.mxu0 %v996
    %1459 = vmatprep.subr.bf16.mxu0 %v993
    %1460 = vmatpush1.bf16.msra.mxu0 %v992
    %1461 = vmatprep.subr.bf16.mxu0 %v989
    %1462 = vmatpush1.bf16.msra.mxu0 %v988
    %1463 = vmatprep.subr.bf16.mxu0 %v1049
    %1464 = vmatpush2.bf16.msra.mxu0 %v1048
    %1465 = vmatprep.subr.bf16.mxu0 %v1045
    %1466 = vmatpush2.bf16.msra.mxu0 %v1044
    %1467 = vmatprep.subr.bf16.mxu0 %v1041
    %1468 = vmatpush2.bf16.msra.mxu0 %v1040
    %1469 = vmatprep.subr.bf16.mxu0 %v1037
    %1470 = vmatpush2.bf16.msra.mxu0 %v1036
    %1471 = vmatprep.subr.bf16.mxu0 %v1033
    %1472 = vmatpush2.bf16.msra.mxu0 %v1032
    %1473 = vmatprep.subr.bf16.mxu0 %v1029
    %1474 = vmatpush2.bf16.msra.mxu0 %v1028
    %1475 = vmatprep.subr.bf16.mxu0 %v1025
    %1476 = vmatpush2.bf16.msra.mxu0 %v1024
    %1477 = vmatprep.subr.bf16.mxu0 %v1021
    %1478 = vmatpush2.bf16.msra.mxu0 %v1020
    %1479 = vmatprep.mubr.bf16.mxu0 %v87
    %1480 = vmatmul.mubr.bf16.gmra.mxu0 %v86
    %v1481 = vpop.f32.mrf.mxu0
    %v1482 = vadd.f32 %v1441, %v1481
    %v1483 = vpop.f32.mrf.mxu0
    %v1484 = vadd.f32 %v1443, %v1483
    %v1485 = vpop.f32.mrf.mxu0
    %v1486 = vpop.f32.mrf.mxu0
    %1487 = vdwg.mxu0
    %v1488 = vld [vmem:[#allocation8] sm:$0xff]
    %v1489 = vld [vmem:[#allocation8 + $0x8] sm:$0xff]
    %v1490 = vld [vmem:[#allocation8 + $0x10] sm:$0xff]
    %v1491 = vld [vmem:[#allocation8 + $0x18] sm:$0xff]
    %v1492 = vld [vmem:[#allocation8 + $0x20] sm:$0xff]
    %v1493 = vld [vmem:[#allocation8 + $0x28] sm:$0xff]
    %v1494 = vld [vmem:[#allocation8 + $0x30] sm:$0xff]
    %v1495 = vld [vmem:[#allocation8 + $0x38] sm:$0xff]
    %v1496 = vld [vmem:[#allocation8 + $0x40] sm:$0xff]
    %v1497 = vld [vmem:[#allocation8 + $0x48] sm:$0xff]
    %v1498 = vld [vmem:[#allocation8 + $0x50] sm:$0xff]
    %v1499 = vld [vmem:[#allocation8 + $0x58] sm:$0xff]
    %v1500 = vld [vmem:[#allocation8 + $0x60] sm:$0xff]
    %v1501 = vld [vmem:[#allocation8 + $0x68] sm:$0xff]
    %v1502 = vld [vmem:[#allocation8 + $0x70] sm:$0xff]
    %v1503 = vld [vmem:[#allocation8 + $0x78] sm:$0xff]
    %v1520 = vunpack.c.l.b16 %v1488
    %v1521 = vunpack.c.h.b16 %v1488
    %v1522 = vunpack.c.l.b16 %v1489
    %v1523 = vunpack.c.h.b16 %v1489
    %v1524 = vunpack.c.l.b16 %v1490
    %v1525 = vunpack.c.h.b16 %v1490
    %v1526 = vunpack.c.l.b16 %v1491
    %v1527 = vunpack.c.h.b16 %v1491
    %v1528 = vunpack.c.l.b16 %v1492
    %v1529 = vunpack.c.h.b16 %v1492
    %v1530 = vunpack.c.l.b16 %v1493
    %v1531 = vunpack.c.h.b16 %v1493
    %v1532 = vunpack.c.l.b16 %v1494
    %v1533 = vunpack.c.h.b16 %v1494
    %v1534 = vunpack.c.l.b16 %v1495
    %v1535 = vunpack.c.h.b16 %v1495
    %v1536 = vunpack.c.l.b16 %v1496
    %v1537 = vunpack.c.h.b16 %v1496
    %v1538 = vunpack.c.l.b16 %v1497
    %v1539 = vunpack.c.h.b16 %v1497
    %v1540 = vunpack.c.l.b16 %v1498
    %v1541 = vunpack.c.h.b16 %v1498
    %v1542 = vunpack.c.l.b16 %v1499
    %v1543 = vunpack.c.h.b16 %v1499
    %v1544 = vunpack.c.l.b16 %v1500
    %v1545 = vunpack.c.h.b16 %v1500
    %v1546 = vunpack.c.l.b16 %v1501
    %v1547 = vunpack.c.h.b16 %v1501
    %v1548 = vunpack.c.l.b16 %v1502
    %v1549 = vunpack.c.h.b16 %v1502
    %v1550 = vunpack.c.l.b16 %v1503
    %v1551 = vunpack.c.h.b16 %v1503
    %v1552 = vpack.c.b16 %v1524, %v1520
    %v1553 = vpack.c.b16 %v1525, %v1521
    %v1554 = vpack.c.b16 %v1526, %v1522
    %v1555 = vpack.c.b16 %v1527, %v1523
    %v1556 = vpack.c.b16 %v1532, %v1528
    %v1557 = vpack.c.b16 %v1533, %v1529
    %v1558 = vpack.c.b16 %v1534, %v1530
    %v1559 = vpack.c.b16 %v1535, %v1531
    %v1560 = vpack.c.b16 %v1540, %v1536
    %v1561 = vpack.c.b16 %v1541, %v1537
    %v1562 = vpack.c.b16 %v1542, %v1538
    %v1563 = vpack.c.b16 %v1543, %v1539
    %v1564 = vpack.c.b16 %v1548, %v1544
    %v1565 = vpack.c.b16 %v1549, %v1545
    %v1566 = vpack.c.b16 %v1550, %v1546
    %v1567 = vpack.c.b16 %v1551, %v1547
    %vm1584 = vcmask 523264
    %v1586 = vsel %vm1584, %v89, 0
    %1588 = vmatprep.subr.bf16.mxu0 0
    %1589 = vmatpush1.bf16.msra.mxu0 0
    %1590 = vmatprep.subr.bf16.mxu0 0
    %1591 = vmatpush1.bf16.msra.mxu0 0
    %1592 = vmatprep.subr.bf16.mxu0 0
    %1593 = vmatpush1.bf16.msra.mxu0 0
    %1594 = vmatprep.subr.bf16.mxu0 0
    %1595 = vmatpush1.bf16.msra.mxu0 0
    %1596 = vmatprep.subr.bf16.mxu0 %v1565
    %1597 = vmatpush1.bf16.msra.mxu0 %v1564
    %1598 = vmatprep.subr.bf16.mxu0 %v1561
    %1599 = vmatpush1.bf16.msra.mxu0 %v1560
    %1600 = vmatprep.subr.bf16.mxu0 %v1557
    %1601 = vmatpush1.bf16.msra.mxu0 %v1556
    %1602 = vmatprep.subr.bf16.mxu0 %v1553
    %1603 = vmatpush1.bf16.msra.mxu0 %v1552
    %1604 = vmatprep.subr.bf16.mxu0 0
    %1605 = vmatpush2.bf16.msra.mxu0 0
    %1606 = vmatprep.subr.bf16.mxu0 0
    %1607 = vmatpush2.bf16.msra.mxu0 0
    %1608 = vmatprep.subr.bf16.mxu0 0
    %1609 = vmatpush2.bf16.msra.mxu0 0
    %1610 = vmatprep.subr.bf16.mxu0 0
    %1611 = vmatpush2.bf16.msra.mxu0 0
    %1612 = vmatprep.subr.bf16.mxu0 0
    %1613 = vmatpush2.bf16.msra.mxu0 0
    %1614 = vmatprep.subr.bf16.mxu0 0
    %1615 = vmatpush2.bf16.msra.mxu0 0
    %1616 = vmatprep.subr.bf16.mxu0 0
    %1617 = vmatpush2.bf16.msra.mxu0 0
    %1618 = vmatprep.subr.bf16.mxu0 0
    %1619 = vmatpush2.bf16.msra.mxu0 0
    %1620 = vmatprep.mubr.bf16.mxu0 0
    %1621 = vmatmul.mubr.bf16.gmra.mxu0 %v1586
    %v1622 = vpop.f32.mrf.mxu0
    %v1623 = vadd.f32 0.0, %v1622
    %v1624 = vpop.f32.mrf.mxu0
    %v1625 = vadd.f32 0.0, %v1624
    %v1626 = vpop.f32.mrf.mxu0
    %v1627 = vpop.f32.mrf.mxu0
    %1628 = vdwg.mxu0
    %1629 = vmatprep.subr.bf16.mxu0 0
    %1630 = vmatpush1.bf16.msra.mxu0 0
    %1631 = vmatprep.subr.bf16.mxu0 0
    %1632 = vmatpush1.bf16.msra.mxu0 0
    %1633 = vmatprep.subr.bf16.mxu0 0
    %1634 = vmatpush1.bf16.msra.mxu0 0
    %1635 = vmatprep.subr.bf16.mxu0 0
    %1636 = vmatpush1.bf16.msra.mxu0 0
    %1637 = vmatprep.subr.bf16.mxu0 %v1567
    %1638 = vmatpush1.bf16.msra.mxu0 %v1566
    %1639 = vmatprep.subr.bf16.mxu0 %v1563
    %1640 = vmatpush1.bf16.msra.mxu0 %v1562
    %1641 = vmatprep.subr.bf16.mxu0 %v1559
    %1642 = vmatpush1.bf16.msra.mxu0 %v1558
    %1643 = vmatprep.subr.bf16.mxu0 %v1555
    %1644 = vmatpush1.bf16.msra.mxu0 %v1554
    %1645 = vmatprep.subr.bf16.mxu0 0
    %1646 = vmatpush2.bf16.msra.mxu0 0
    %1647 = vmatprep.subr.bf16.mxu0 0
    %1648 = vmatpush2.bf16.msra.mxu0 0
    %1649 = vmatprep.subr.bf16.mxu0 0
    %1650 = vmatpush2.bf16.msra.mxu0 0
    %1651 = vmatprep.subr.bf16.mxu0 0
    %1652 = vmatpush2.bf16.msra.mxu0 0
    %1653 = vmatprep.subr.bf16.mxu0 0
    %1654 = vmatpush2.bf16.msra.mxu0 0
    %1655 = vmatprep.subr.bf16.mxu0 0
    %1656 = vmatpush2.bf16.msra.mxu0 0
    %1657 = vmatprep.subr.bf16.mxu0 0
    %1658 = vmatpush2.bf16.msra.mxu0 0
    %1659 = vmatprep.subr.bf16.mxu0 0
    %1660 = vmatpush2.bf16.msra.mxu0 0
    %1661 = vmatprep.mubr.bf16.mxu0 0
    %1662 = vmatmul.mubr.bf16.gmra.mxu0 %v1586
    %v1663 = vpop.f32.mrf.mxu0
    %v1664 = vadd.f32 0.0, %v1663
    %v1665 = vpop.f32.mrf.mxu0
    %v1666 = vadd.f32 0.0, %v1665
    %v1667 = vpop.f32.mrf.mxu0
    %v1668 = vpop.f32.mrf.mxu0
    %1669 = vdwg.mxu0
    %v1670 = vmul.f32 %v1359, %v1359
    %v1671 = vmul.f32 %v1361, %v1361
    %v1672 = vmul.f32 %v1482, %v1482
    %v1673 = vmul.f32 %v1484, %v1484
    %v1674 = vadd.f32 %v1670, %v1671
    %v1675 = vadd.f32 %v1674, %v1672
    %v1676 = vadd.f32 %v1675, %v1673
    %1677 = vadd.xlane.f32.xlu0 %v1676
    %v1678 = vpop.xlane.xlu0 %1677
    %v1679 = vmax.f32 %v1678, 1e-24
    %v1680 = vrsqrt.pop %v1679
    %v1681 = vmul.f32 %v1359, %v1680
    %v1682 = vmul.f32 %v1361, %v1680
    %v1683 = vmul.f32 %v1482, %v1680
    %v1684 = vmul.f32 %v1484, %v1680
    %v1685 = vld [vmem:[%s4] sm:$0xf]
    %v1686 = vmul.f32 %v1685, 0.25
    %v1688 = vlaneseq
    %v1689 = vshrl.u32 %v1688, 7
    %v1690 = vsub.s32 0, %v1689
    %v1691 = vrot.slane %v1686, %v1690
    %v1692 = vlaneseq
    %v1693 = vshrl.u32 %v1692, 7
    %v1694 = vsub.s32 1, %v1693
    %v1695 = vrot.slane %v1686, %v1694
    %v1696 = vlaneseq
    %v1697 = vshrl.u32 %v1696, 7
    %v1698 = vsub.s32 2, %v1697
    %v1699 = vrot.slane %v1686, %v1698
    %v1700 = vlaneseq
    %v1701 = vshrl.u32 %v1700, 7
    %v1702 = vsub.s32 3, %v1701
    %v1703 = vrot.slane %v1686, %v1702
    %v1708 = vsub.f32 %v1681, %v1691
    %v1709 = vsub.f32 %v1682, %v1695
    %v1710 = vsub.f32 %v1683, %v1699
    %v1711 = vsub.f32 %v1684, %v1703
    %v1712 = vmul.f32 %v1623, %v1623
    %v1713 = vmul.f32 %v1625, %v1625
    %v1714 = vmul.f32 %v1664, %v1664
    %v1715 = vmul.f32 %v1666, %v1666
    %v1716 = vadd.f32 %v1712, %v1713
    %v1717 = vadd.f32 %v1716, %v1714
    %v1718 = vadd.f32 %v1717, %v1715
    %1719 = vadd.xlane.f32.xlu0 %v1718
    %v1720 = vpop.xlane.xlu0 %1719
    %v1721 = vmax.f32 %v1720, 1e-24
    %v1722 = vrsqrt.pop %v1721
    %v1723 = vmul.f32 %v1623, %v1722
    %v1724 = vmul.f32 %v1625, %v1722
    %v1725 = vmul.f32 %v1664, %v1722
    %v1726 = vmul.f32 %v1666, %v1722
    %v1727 = vld [vmem:[%s5] sm:$0xf]
    %v1728 = vmul.f32 %v1727, 0.25
    %v1730 = vlaneseq
    %v1731 = vshrl.u32 %v1730, 7
    %v1732 = vsub.s32 0, %v1731
    %v1733 = vrot.slane %v1728, %v1732
    %v1734 = vlaneseq
    %v1735 = vshrl.u32 %v1734, 7
    %v1736 = vsub.s32 1, %v1735
    %v1737 = vrot.slane %v1728, %v1736
    %v1738 = vlaneseq
    %v1739 = vshrl.u32 %v1738, 7
    %v1740 = vsub.s32 2, %v1739
    %v1741 = vrot.slane %v1728, %v1740
    %v1742 = vlaneseq
    %v1743 = vshrl.u32 %v1742, 7
    %v1744 = vsub.s32 3, %v1743
    %v1745 = vrot.slane %v1728, %v1744
    %v1750 = vsub.f32 %v1723, %v1733
    %v1751 = vsub.f32 %v1724, %v1737
    %v1752 = vsub.f32 %v1725, %v1741
    %v1753 = vsub.f32 %v1726, %v1745
    %v1754 = vmul.f32 %v1708, %v1750
    %v1755 = vmul.f32 %v1709, %v1751
    %v1756 = vmul.f32 %v1710, %v1752
    %v1757 = vmul.f32 %v1711, %v1753
    %v1758 = vadd.f32 %v1754, %v1755
    %v1759 = vadd.f32 %v1758, %v1756
    %v1760 = vadd.f32 %v1759, %v1757
    %1761 = vadd.xlane.f32.xlu0 %v1760
    %v1762 = vpop.xlane.xlu0 %1761
    %s1763 = smul.u32 0, 8
    %v1764 = vlaneseq
    %v1765 = vand.u32 %v1764, 127
    %v1766 = vstv %s1763
    %v1767 = vadd.s32 %v1766, %v1765
    %vm1768 = vcmp.lt.s32.totalorder %v1767, 8
    %v1770 = vlaneseq
    %v1771 = vshrl.u32 %v1770, 7
    %v1772 = vsub.s32 %v1765, %v1771
    %v1773 = vrot.slane %v1762, %v1772
    %v1775 = vsel %vm1768, %v1773, 0.0
    %vm1776 = vcmask 57344
    %1777 = vst.msk [vmem:[#allocation10] sm:$0x1] %vm1776, %v1775
    // Predicated region
    $region42: #{tpu_custom_call.1} parent=1 // pred_check
      _
    $region43: #{tpu_custom_call.1} parent=1 // pred_check_branch
      %1779 = sbr.rel (0) target = $region45
    $region44: #{tpu_custom_call.1} parent=1 // pred_region
      %s1781 = ssub.s32 16, 16
      %1782 = vsyncadd [#allocation4], %s1781
      %s1784 = sshll.u32 [#allocation10], 4
      %s1785 = int_to_ptr.vmem [resolvable:$true] %s1784
      %1787 = dma.vmem_to_hbm [thread:$0]  %s1785, 16, %s6, [#allocation4]
    $region45: #{tpu_custom_call.1} parent=1 // pred_fallthru
      _
    // Predicated region
    $region46: #{tpu_custom_call.1} parent=1 // pred_check
      _
    $region47: #{tpu_custom_call.1} parent=1 // pred_check_branch
      %1789 = sbr.rel (0) target = $region49
    $region48: #{tpu_custom_call.1} parent=1 // pred_region
      %1790 = dma.done [#allocation4], 16
    $region49: #{tpu_custom_call.1} parent=1 // pred_fallthru
      _
    %1791 = vsyncpa [#allocation3], 1
    %1792 = vsyncpa [#allocation6], 1
    %1793 = vsyncpa [#allocation9], 1
    %1794 = vsyncpa [#allocation4], 1

</llo_original>
